<compile_context>
chip_gen: v6e
topology: v6e:2x2x1
jax: 0.10.0
libtpu: 0.0.40
codegen_flags: <defaults>
</compile_context>

<pallas_src>
import functools

import jax
import jax.numpy as jnp
from jax.experimental import pallas as pl
from jax.experimental.pallas import tpu as pltpu


def _structural_attention_kernel(x_ref, alpha_l_ref, alpha_r_ref, res_ref,
                                 adj_ref, out_ref, *, n_heads, out_dim):
  """One grid step processes a [t_dst, N_src] row tile of the dst-major adjacency.

  x_ref       : [N, HC]        bf16 projected src features (resident)
  alpha_l_ref : [H, N]         f32 src logits, pre-transposed (resident)
  alpha_r_ref : [t_dst, H]     f32 dst logits tile
  res_ref     : [t_dst, HC_pad] f32 residual tile (zero in the pad columns)
  adj_ref     : [t_dst, N]     bf16 dst-major weighted adjacency (0 => no edge)
  out_ref     : [t_dst, HC_pad] f32 lane-dense output tile
  """
  H, C = n_heads, out_dim
  HC = H * C
  hc_pad = out_ref.shape[1]
  t_dst = adj_ref.shape[0]

  adj_bf = adj_ref[...]                         # [t_dst, N] bf16
  mask = adj_bf > 0                             # edge mask derived in-kernel
  adj = adj_bf.astype(jnp.float32)              # score math in f32
  x = x_ref[...]                                # [N, HC] bf16 (MXU operand)
  alpha_l = alpha_l_ref[...]                    # [H, N] f32 (lane-major rows)
  alpha_r = alpha_r_ref[...]                    # [t_dst, H] f32
  res = res_ref[...]                            # [t_dst, HC_pad] f32
  neg = jnp.float32(-1e30)

  head_outs = []
  for h in range(H):                            # H is static
    al = alpha_l[h, :][None, :]                 # [1, N]  row selection
    ar = alpha_r[:, h:h + 1]                    # [t_dst, 1]
    # alpha = edge_weight * (alpha_l[src] + alpha_r[dst]); LeakyReLU(0.2)
    score = adj * (al + ar)
    score = jnp.where(mask, jnp.maximum(score, 0.2 * score), neg)
    # edge_softmax over incoming edges of each destination row.
    mx = jnp.max(score, axis=-1, keepdims=True)
    e = jnp.exp(score - mx)                     # masked entries underflow to 0
    denom = jnp.sum(e, axis=-1, keepdims=True)
    coeff = (e * pl.reciprocal(denom, approx=True)).astype(jnp.bfloat16)
    # Aggregation: out[dst] = sum_src coeff[dst, src] * x[src, h, :]   (MXU)
    feat_h = jnp.dot(coeff, x[:, h * C:(h + 1) * C],
                     preferred_element_type=jnp.float32)   # [t_dst, C] f32
    # ELU activation.
    feat_h = jnp.where(feat_h > 0, feat_h, jnp.exp(feat_h) - 1.0)
    head_outs.append(feat_h)

  if hc_pad > HC:
    head_outs.append(jnp.zeros((t_dst, hc_pad - HC), jnp.float32))
  # Single lane-dense full-width store (heads + residual combined once).
  out_ref[...] = jnp.concatenate(head_outs, axis=-1) + res


def structural_attention_layer(feature, adj_w, w_lin, att_l, att_r, w_res, *,
                               n_heads, out_dim, t_dst=None):
  """adj_w is src-major [N_src, N_dst]; 0 where there is no edge; edge weights
  must be strictly positive (mask == adj > 0).  Every destination node must
  have at least one incoming edge (e.g. self-loops) for the masked softmax to
  match dgl.edge_softmax.  All layout plumbing (transpose, alpha packing,
  output padding) happens here, outside the kernel."""
  feature = jnp.asarray(feature, jnp.float32)
  N, D = feature.shape
  H, C = n_heads, out_dim
  HC = H * C
  HC_pad = ((HC + 127) // 128) * 128            # lane-dense output width

  if t_dst is None:
    # 512 sits inside the recommended range for v5e/v6e (128 MiB VMEM) and at
    # the cap for v7x (64 MiB VMEM).
    if N <= 512:
      t_dst = N
    else:
      t_dst = N
      for cand in (512, 256, 128, 64, 32, 16):
        if N % cand == 0:
          t_dst = cand
          break
      # TODO(synk): for very large / awkward N, add a src-axis grid with
      # flash-style online softmax instead of keeping x[N,HC] resident.
  assert N % t_dst == 0, "N must be a multiple of the dst tile size"
  assert t_dst == N or t_dst % 16 == 0, \
      "dst tile must be a multiple of 16 (bf16 sublane packing) or equal N"

  # --- Hoisted, grid-invariant computation (done once, plain XLA) ---------
  x = jnp.dot(feature, jnp.asarray(w_lin, jnp.float32),
              precision="highest")                           # [N, HC]
  res = jnp.dot(feature, jnp.asarray(w_res, jnp.float32),
                precision="highest")                         # [N, HC]
  x3 = x.reshape(N, H, C)
  alpha_l = jnp.einsum("nhc,hc->nh", x3, jnp.asarray(att_l, jnp.float32),
                       precision="highest")                  # [N, H]
  alpha_r = jnp.einsum("nhc,hc->nh", x3, jnp.asarray(att_r, jnp.float32),
                       precision="highest")                  # [N, H]
  alpha_l_t = alpha_l.T                                      # [H, N]
  res_pad = jnp.pad(res, ((0, 0), (0, HC_pad - HC)))         # [N, HC_pad]
  x_bf = x.astype(jnp.bfloat16)                              # MXU operand
  adj_t = jnp.asarray(adj_w).T.astype(jnp.bfloat16)          # [dst, src] bf16

  kernel = functools.partial(_structural_attention_kernel,
                             n_heads=H, out_dim=C)

  out_pad = pl.pallas_call(
      kernel,
      out_shape=jax.ShapeDtypeStruct((N, HC_pad), jnp.float32),
      grid_spec=pltpu.PrefetchScalarGridSpec(
          num_scalar_prefetch=0,
          grid=(N // t_dst,),
          in_specs=[
              pl.BlockSpec((N, HC), lambda i: (0, 0)),         # x (resident)
              pl.BlockSpec((H, N), lambda i: (0, 0)),          # alpha_l^T (resident)
              pl.BlockSpec((t_dst, H), lambda i: (i, 0)),      # alpha_r dst tile
              pl.BlockSpec((t_dst, HC_pad), lambda i: (i, 0)), # residual dst tile
              pl.BlockSpec((t_dst, N), lambda i: (i, 0)),      # adjacency dst tile
          ],
          out_specs=pl.BlockSpec((t_dst, HC_pad), lambda i: (i, 0)),
      ),
      compiler_params=pltpu.CompilerParams(
          dimension_semantics=("parallel",),
          vmem_limit_bytes=64 * 1024 * 1024),
  )(x_bf, alpha_l_t, alpha_r, res_pad, adj_t)

  return out_pad[:, :HC]


def reference(feature, adj_w, mask, w_lin, att_l, att_r, w_res, n_heads,
              out_dim):
  """Pure-JAX f32 reference of the same dense formulation (src-major adj)."""
  H, C = n_heads, out_dim
  x = jnp.dot(feature, w_lin, precision="highest")
  N = x.shape[0]
  x = x.reshape(N, H, C)
  al = (x * att_l[None]).sum(-1)                              # [N, H]
  ar = (x * att_r[None]).sum(-1)                              # [N, H]
  score = adj_w[:, :, None] * (al[:, None, :] + ar[None, :, :])
  score = jnp.where(score > 0, score, 0.2 * score)
  score = jnp.where(mask[:, :, None] > 0, score, -1e30)
  mx = score.max(axis=0, keepdims=True)
  e = jnp.exp(score - mx) * mask[:, :, None]
  coeff = e / e.sum(axis=0, keepdims=True)                    # [src, dst, H]
  feat = jnp.einsum("idh,ihc->dhc", coeff, x, precision="highest")
  out = jnp.where(feat > 0, feat, jnp.exp(feat) - 1.0).reshape(N, H * C)
  return out + jnp.dot(feature, w_res, precision="highest")


if __name__ == "__main__":
  # Small shapes: N=128 nodes, input_dim=32, output_dim=32, n_heads=4 -> C=8.
  N, input_dim, output_dim, n_heads = 128, 32, 32, 4
  out_dim = output_dim // n_heads

  key = jax.random.PRNGKey(0)
  k_feat, k_wl, k_al, k_ar, k_wr, k_adj, k_mask = jax.random.split(key, 7)

  feature = jax.random.normal(k_feat, (N, input_dim), dtype=jnp.float32)

  # Deterministic parameter init (shapes from the module's __init__).
  w_lin = jax.random.normal(k_wl, (input_dim, n_heads * out_dim),
                            dtype=jnp.float32) * 0.1
  att_l = jax.random.normal(k_al, (n_heads, out_dim), dtype=jnp.float32) * 0.1
  att_r = jax.random.normal(k_ar, (n_heads, out_dim), dtype=jnp.float32) * 0.1
  w_res = jax.random.normal(k_wr, (input_dim, n_heads * out_dim),
                            dtype=jnp.float32) * 0.1

  # Random sparse-ish graph as a dense weighted adjacency.  Edge weights are
  # strictly positive, so "mask == (adj_w > 0)" is exact.  Self-loops
  # guarantee every destination node has at least one incoming edge (so the
  # dense masked softmax matches dgl.edge_softmax exactly).
  mask = (jax.random.uniform(k_mask, (N, N)) < 0.1).astype(jnp.float32)
  mask = jnp.maximum(mask, jnp.eye(N, dtype=jnp.float32))
  edge_vals = jax.random.uniform(k_adj, (N, N), minval=0.1, maxval=1.0)
  adj_w = (edge_vals * mask).astype(jnp.float32)

  out = structural_attention_layer(
      feature, adj_w, w_lin, att_l, att_r, w_res,
      n_heads=n_heads, out_dim=out_dim, t_dst=64)   # grid of 2 dst tiles
  out = jax.block_until_ready(out)

  ref = reference(feature, adj_w, mask, w_lin, att_l, att_r, w_res,
                  n_heads, out_dim)
  assert out.shape == (N, n_heads * out_dim)
  assert bool(jnp.all(jnp.isfinite(out)))
  # Tolerance relaxed slightly for the bf16 adjacency / bf16 MXU operands and
  # the approximate softmax reciprocal (errors measured well below 1e-2).
  assert bool(jnp.allclose(out, ref, rtol=2e-2, atol=2e-2))

  # TODO(synk): dgl graph object plumbing (copy.deepcopy(g), graph.ndata
  # assignment) and Dropout (training mode) have no kernel equivalent; the
  # kernel returns the updated node-feature tensor directly in eval mode.
  print("KERNEL_OK")
</pallas_src>

<mosaic_0001>
module attributes {stable_mosaic.version = 11 : i64} {
  func.func @_structural_attention_kernel(%arg0: i32, %arg1: memref<128x32xbf16, #tpu.memory_space<vmem>>, %arg2: memref<4x128xf32, #tpu.memory_space<vmem>>, %arg3: memref<64x4xf32, #tpu.memory_space<vmem>>, %arg4: memref<64x128xf32, #tpu.memory_space<vmem>>, %arg5: memref<64x128xbf16, #tpu.memory_space<vmem>>, %arg6: memref<64x128xf32, #tpu.memory_space<vmem>>) attributes {dimension_semantics = [#tpu.dimension_semantics<parallel>], iteration_bounds = array<i64: 2>, scalar_prefetch = 0 : i64, scratch_operands = 0 : i64, tpu.core_type = #tpu.core_type<tc>, window_params = [{pipeline_mode = #tpu.pipeline_mode<synchronous>, transform_indices = @transform_0, window_bounds = array<i64: 128, 32>}, {pipeline_mode = #tpu.pipeline_mode<synchronous>, transform_indices = @transform_1, window_bounds = array<i64: 4, 128>}, {transform_indices = @transform_2, window_bounds = array<i64: 64, 4>}, {transform_indices = @transform_3, window_bounds = array<i64: 64, 128>}, {transform_indices = @transform_4, window_bounds = array<i64: 64, 128>}, {transform_indices = @transform_5, window_bounds = array<i64: 64, 128>}]} {
    %c0 = arith.constant 0 : index
    %c0_0 = arith.constant 0 : index
    %0 = vector.load %arg5[%c0, %c0_0] : memref<64x128xbf16, #tpu.memory_space<vmem>>, vector<64x128xbf16>
    %cst = arith.constant 0.000000e+00 : bf16
    %1 = vector.broadcast %cst : bf16 to vector<64x128xbf16>
    %2 = arith.cmpf ogt, %0, %1 : vector<64x128xbf16>
    %3 = arith.extf %0 : vector<64x128xbf16> to vector<64x128xf32>
    %c0_1 = arith.constant 0 : index
    %c0_2 = arith.constant 0 : index
    %4 = vector.load %arg1[%c0_1, %c0_2] : memref<128x32xbf16, #tpu.memory_space<vmem>>, vector<128x32xbf16>
    %c0_3 = arith.constant 0 : index
    %c0_4 = arith.constant 0 : index
    %5 = vector.load %arg2[%c0_3, %c0_4] : memref<4x128xf32, #tpu.memory_space<vmem>>, vector<4x128xf32>
    %c0_5 = arith.constant 0 : index
    %c0_6 = arith.constant 0 : index
    %6 = vector.load %arg3[%c0_5, %c0_6] : memref<64x4xf32, #tpu.memory_space<vmem>>, vector<64x4xf32>
    %c0_7 = arith.constant 0 : index
    %c0_8 = arith.constant 0 : index
    %7 = vector.load %arg4[%c0_7, %c0_8] : memref<64x128xf32, #tpu.memory_space<vmem>>, vector<64x128xf32>
    %8 = vector.extract_strided_slice %5 {offsets = [0, 0], sizes = [1, 128], strides = [1, 1]} : vector<4x128xf32> to vector<1x128xf32>
    %9 = vector.shape_cast %8 : vector<1x128xf32> to vector<128xf32>
    %10 = vector.shape_cast %9 : vector<128xf32> to vector<1x128xf32>
    %11 = vector.extract_strided_slice %6 {offsets = [0, 0], sizes = [64, 1], strides = [1, 1]} : vector<64x4xf32> to vector<64x1xf32>
    %12 = vector.broadcast %10 : vector<1x128xf32> to vector<64x128xf32>
    %13 = vector.broadcast %11 : vector<64x1xf32> to vector<64x128xf32>
    %14 = arith.addf %12, %13 : vector<64x128xf32>
    %15 = arith.mulf %3, %14 : vector<64x128xf32>
    %cst_9 = arith.constant 2.000000e-01 : f32
    %16 = vector.broadcast %cst_9 : f32 to vector<64x128xf32>
    %17 = arith.mulf %16, %15 : vector<64x128xf32>
    %18 = arith.maximumf %15, %17 : vector<64x128xf32>
    %cst_10 = arith.constant -1.000000e+30 : f32
    %19 = vector.broadcast %cst_10 : f32 to vector<64x128xf32>
    %20 = arith.select %2, %18, %19 : vector<64x128xi1>, vector<64x128xf32>
    %cst_11 = arith.constant dense<0xFF800000> : vector<64xf32>
    %21 = vector.multi_reduction <maximumf>, %20, %cst_11 [1] : vector<64x128xf32> to vector<64xf32>
    %22 = vector.shape_cast %21 : vector<64xf32> to vector<64x1xf32>
    %23 = vector.broadcast %22 : vector<64x1xf32> to vector<64x128xf32>
    %24 = arith.subf %20, %23 : vector<64x128xf32>
    %25 = math.exp %24 : vector<64x128xf32>
    %cst_12 = arith.constant dense<0.000000e+00> : vector<64xf32>
    %26 = vector.multi_reduction <add>, %25, %cst_12 [1] : vector<64x128xf32> to vector<64xf32>
    %27 = vector.shape_cast %26 : vector<64xf32> to vector<64x1xf32>
    %28 = tpu.reciprocal %27 {approx = true} : vector<64x1xf32> -> vector<64x1xf32>
    %29 = vector.broadcast %28 : vector<64x1xf32> to vector<64x128xf32>
    %30 = arith.mulf %25, %29 : vector<64x128xf32>
    %31 = arith.truncf %30 : vector<64x128xf32> to vector<64x128xbf16>
    %32 = vector.extract_strided_slice %4 {offsets = [0, 0], sizes = [128, 8], strides = [1, 1]} : vector<128x32xbf16> to vector<128x8xbf16>
    %cst_13 = arith.constant dense<0.000000e+00> : vector<64x8xf32>
    %33 = tpu.matmul %31, %32, %cst_13 {dimension_numbers = #tpu.dot_dimension_numbers<[1], [0], [0], [1], [0, 0, 1, 1], [], []>} : vector<64x128xbf16>, vector<128x8xbf16>, vector<64x8xf32> -> vector<64x8xf32>
    %cst_14 = arith.constant 0.000000e+00 : f32
    %34 = vector.broadcast %cst_14 : f32 to vector<64x8xf32>
    %35 = arith.cmpf ogt, %33, %34 : vector<64x8xf32>
    %36 = math.exp %33 : vector<64x8xf32>
    %cst_15 = arith.constant 1.000000e+00 : f32
    %37 = vector.broadcast %cst_15 : f32 to vector<64x8xf32>
    %38 = arith.subf %36, %37 : vector<64x8xf32>
    %39 = arith.select %35, %33, %38 : vector<64x8xi1>, vector<64x8xf32>
    %40 = vector.extract_strided_slice %5 {offsets = [1, 0], sizes = [1, 128], strides = [1, 1]} : vector<4x128xf32> to vector<1x128xf32>
    %41 = vector.shape_cast %40 : vector<1x128xf32> to vector<128xf32>
    %42 = vector.shape_cast %41 : vector<128xf32> to vector<1x128xf32>
    %43 = vector.extract_strided_slice %6 {offsets = [0, 1], sizes = [64, 1], strides = [1, 1]} : vector<64x4xf32> to vector<64x1xf32>
    %44 = vector.broadcast %42 : vector<1x128xf32> to vector<64x128xf32>
    %45 = vector.broadcast %43 : vector<64x1xf32> to vector<64x128xf32>
    %46 = arith.addf %44, %45 : vector<64x128xf32>
    %47 = arith.mulf %3, %46 : vector<64x128xf32>
    %cst_16 = arith.constant 2.000000e-01 : f32
    %48 = vector.broadcast %cst_16 : f32 to vector<64x128xf32>
    %49 = arith.mulf %48, %47 : vector<64x128xf32>
    %50 = arith.maximumf %47, %49 : vector<64x128xf32>
    %cst_17 = arith.constant -1.000000e+30 : f32
    %51 = vector.broadcast %cst_17 : f32 to vector<64x128xf32>
    %52 = arith.select %2, %50, %51 : vector<64x128xi1>, vector<64x128xf32>
    %cst_18 = arith.constant dense<0xFF800000> : vector<64xf32>
    %53 = vector.multi_reduction <maximumf>, %52, %cst_18 [1] : vector<64x128xf32> to vector<64xf32>
    %54 = vector.shape_cast %53 : vector<64xf32> to vector<64x1xf32>
    %55 = vector.broadcast %54 : vector<64x1xf32> to vector<64x128xf32>
    %56 = arith.subf %52, %55 : vector<64x128xf32>
    %57 = math.exp %56 : vector<64x128xf32>
    %cst_19 = arith.constant dense<0.000000e+00> : vector<64xf32>
    %58 = vector.multi_reduction <add>, %57, %cst_19 [1] : vector<64x128xf32> to vector<64xf32>
    %59 = vector.shape_cast %58 : vector<64xf32> to vector<64x1xf32>
    %60 = tpu.reciprocal %59 {approx = true} : vector<64x1xf32> -> vector<64x1xf32>
    %61 = vector.broadcast %60 : vector<64x1xf32> to vector<64x128xf32>
    %62 = arith.mulf %57, %61 : vector<64x128xf32>
    %63 = arith.truncf %62 : vector<64x128xf32> to vector<64x128xbf16>
    %64 = vector.extract_strided_slice %4 {offsets = [0, 8], sizes = [128, 8], strides = [1, 1]} : vector<128x32xbf16> to vector<128x8xbf16>
    %cst_20 = arith.constant dense<0.000000e+00> : vector<64x8xf32>
    %65 = tpu.matmul %63, %64, %cst_20 {dimension_numbers = #tpu.dot_dimension_numbers<[1], [0], [0], [1], [0, 0, 1, 1], [], []>} : vector<64x128xbf16>, vector<128x8xbf16>, vector<64x8xf32> -> vector<64x8xf32>
    %cst_21 = arith.constant 0.000000e+00 : f32
    %66 = vector.broadcast %cst_21 : f32 to vector<64x8xf32>
    %67 = arith.cmpf ogt, %65, %66 : vector<64x8xf32>
    %68 = math.exp %65 : vector<64x8xf32>
    %cst_22 = arith.constant 1.000000e+00 : f32
    %69 = vector.broadcast %cst_22 : f32 to vector<64x8xf32>
    %70 = arith.subf %68, %69 : vector<64x8xf32>
    %71 = arith.select %67, %65, %70 : vector<64x8xi1>, vector<64x8xf32>
    %72 = vector.extract_strided_slice %5 {offsets = [2, 0], sizes = [1, 128], strides = [1, 1]} : vector<4x128xf32> to vector<1x128xf32>
    %73 = vector.shape_cast %72 : vector<1x128xf32> to vector<128xf32>
    %74 = vector.shape_cast %73 : vector<128xf32> to vector<1x128xf32>
    %75 = vector.extract_strided_slice %6 {offsets = [0, 2], sizes = [64, 1], strides = [1, 1]} : vector<64x4xf32> to vector<64x1xf32>
    %76 = vector.broadcast %74 : vector<1x128xf32> to vector<64x128xf32>
    %77 = vector.broadcast %75 : vector<64x1xf32> to vector<64x128xf32>
    %78 = arith.addf %76, %77 : vector<64x128xf32>
    %79 = arith.mulf %3, %78 : vector<64x128xf32>
    %cst_23 = arith.constant 2.000000e-01 : f32
    %80 = vector.broadcast %cst_23 : f32 to vector<64x128xf32>
    %81 = arith.mulf %80, %79 : vector<64x128xf32>
    %82 = arith.maximumf %79, %81 : vector<64x128xf32>
    %cst_24 = arith.constant -1.000000e+30 : f32
    %83 = vector.broadcast %cst_24 : f32 to vector<64x128xf32>
    %84 = arith.select %2, %82, %83 : vector<64x128xi1>, vector<64x128xf32>
    %cst_25 = arith.constant dense<0xFF800000> : vector<64xf32>
    %85 = vector.multi_reduction <maximumf>, %84, %cst_25 [1] : vector<64x128xf32> to vector<64xf32>
    %86 = vector.shape_cast %85 : vector<64xf32> to vector<64x1xf32>
    %87 = vector.broadcast %86 : vector<64x1xf32> to vector<64x128xf32>
    %88 = arith.subf %84, %87 : vector<64x128xf32>
    %89 = math.exp %88 : vector<64x128xf32>
    %cst_26 = arith.constant dense<0.000000e+00> : vector<64xf32>
    %90 = vector.multi_reduction <add>, %89, %cst_26 [1] : vector<64x128xf32> to vector<64xf32>
    %91 = vector.shape_cast %90 : vector<64xf32> to vector<64x1xf32>
    %92 = tpu.reciprocal %91 {approx = true} : vector<64x1xf32> -> vector<64x1xf32>
    %93 = vector.broadcast %92 : vector<64x1xf32> to vector<64x128xf32>
    %94 = arith.mulf %89, %93 : vector<64x128xf32>
    %95 = arith.truncf %94 : vector<64x128xf32> to vector<64x128xbf16>
    %96 = vector.extract_strided_slice %4 {offsets = [0, 16], sizes = [128, 8], strides = [1, 1]} : vector<128x32xbf16> to vector<128x8xbf16>
    %cst_27 = arith.constant dense<0.000000e+00> : vector<64x8xf32>
    %97 = tpu.matmul %95, %96, %cst_27 {dimension_numbers = #tpu.dot_dimension_numbers<[1], [0], [0], [1], [0, 0, 1, 1], [], []>} : vector<64x128xbf16>, vector<128x8xbf16>, vector<64x8xf32> -> vector<64x8xf32>
    %cst_28 = arith.constant 0.000000e+00 : f32
    %98 = vector.broadcast %cst_28 : f32 to vector<64x8xf32>
    %99 = arith.cmpf ogt, %97, %98 : vector<64x8xf32>
    %100 = math.exp %97 : vector<64x8xf32>
    %cst_29 = arith.constant 1.000000e+00 : f32
    %101 = vector.broadcast %cst_29 : f32 to vector<64x8xf32>
    %102 = arith.subf %100, %101 : vector<64x8xf32>
    %103 = arith.select %99, %97, %102 : vector<64x8xi1>, vector<64x8xf32>
    %104 = vector.extract_strided_slice %5 {offsets = [3, 0], sizes = [1, 128], strides = [1, 1]} : vector<4x128xf32> to vector<1x128xf32>
    %105 = vector.shape_cast %104 : vector<1x128xf32> to vector<128xf32>
    %106 = vector.shape_cast %105 : vector<128xf32> to vector<1x128xf32>
    %107 = vector.extract_strided_slice %6 {offsets = [0, 3], sizes = [64, 1], strides = [1, 1]} : vector<64x4xf32> to vector<64x1xf32>
    %108 = vector.broadcast %106 : vector<1x128xf32> to vector<64x128xf32>
    %109 = vector.broadcast %107 : vector<64x1xf32> to vector<64x128xf32>
    %110 = arith.addf %108, %109 : vector<64x128xf32>
    %111 = arith.mulf %3, %110 : vector<64x128xf32>
    %cst_30 = arith.constant 2.000000e-01 : f32
    %112 = vector.broadcast %cst_30 : f32 to vector<64x128xf32>
    %113 = arith.mulf %112, %111 : vector<64x128xf32>
    %114 = arith.maximumf %111, %113 : vector<64x128xf32>
    %cst_31 = arith.constant -1.000000e+30 : f32
    %115 = vector.broadcast %cst_31 : f32 to vector<64x128xf32>
    %116 = arith.select %2, %114, %115 : vector<64x128xi1>, vector<64x128xf32>
    %cst_32 = arith.constant dense<0xFF800000> : vector<64xf32>
    %117 = vector.multi_reduction <maximumf>, %116, %cst_32 [1] : vector<64x128xf32> to vector<64xf32>
    %118 = vector.shape_cast %117 : vector<64xf32> to vector<64x1xf32>
    %119 = vector.broadcast %118 : vector<64x1xf32> to vector<64x128xf32>
    %120 = arith.subf %116, %119 : vector<64x128xf32>
    %121 = math.exp %120 : vector<64x128xf32>
    %cst_33 = arith.constant dense<0.000000e+00> : vector<64xf32>
    %122 = vector.multi_reduction <add>, %121, %cst_33 [1] : vector<64x128xf32> to vector<64xf32>
    %123 = vector.shape_cast %122 : vector<64xf32> to vector<64x1xf32>
    %124 = tpu.reciprocal %123 {approx = true} : vector<64x1xf32> -> vector<64x1xf32>
    %125 = vector.broadcast %124 : vector<64x1xf32> to vector<64x128xf32>
    %126 = arith.mulf %121, %125 : vector<64x128xf32>
    %127 = arith.truncf %126 : vector<64x128xf32> to vector<64x128xbf16>
    %128 = vector.extract_strided_slice %4 {offsets = [0, 24], sizes = [128, 8], strides = [1, 1]} : vector<128x32xbf16> to vector<128x8xbf16>
    %cst_34 = arith.constant dense<0.000000e+00> : vector<64x8xf32>
    %129 = tpu.matmul %127, %128, %cst_34 {dimension_numbers = #tpu.dot_dimension_numbers<[1], [0], [0], [1], [0, 0, 1, 1], [], []>} : vector<64x128xbf16>, vector<128x8xbf16>, vector<64x8xf32> -> vector<64x8xf32>
    %cst_35 = arith.constant 0.000000e+00 : f32
    %130 = vector.broadcast %cst_35 : f32 to vector<64x8xf32>
    %131 = arith.cmpf ogt, %129, %130 : vector<64x8xf32>
    %132 = math.exp %129 : vector<64x8xf32>
    %cst_36 = arith.constant 1.000000e+00 : f32
    %133 = vector.broadcast %cst_36 : f32 to vector<64x8xf32>
    %134 = arith.subf %132, %133 : vector<64x8xf32>
    %135 = arith.select %131, %129, %134 : vector<64x8xi1>, vector<64x8xf32>
    %cst_37 = arith.constant 0.000000e+00 : f32
    %136 = vector.broadcast %cst_37 : f32 to vector<64x96xf32>
    %137 = tpu.concatenate %39, %71, %103, %135, %136 in 1 : vector<64x8xf32>, vector<64x8xf32>, vector<64x8xf32>, vector<64x8xf32>, vector<64x96xf32> -> vector<64x128xf32>
    %138 = arith.addf %137, %7 : vector<64x128xf32>
    %c0_38 = arith.constant 0 : index
    %c0_39 = arith.constant 0 : index
    %139 = vector.load %arg6[%c0_38, %c0_39] : memref<64x128xf32, #tpu.memory_space<vmem>>, vector<64x128xf32>
    tpu.vector_store %arg6[%c0_38, %c0_39], %138 {strides = array<i32>} : memref<64x128xf32, #tpu.memory_space<vmem>>, vector<64x128xf32>,
    return
  }
  func.func @transform_0(%arg0: i32) -> (i32, i32) {
    %c0_i32 = arith.constant 0 : i32
    %c0_i32_0 = arith.constant 0 : i32
    %c0_i32_1 = arith.constant 0 : i32
    return %c0_i32, %c0_i32_0 : i32, i32
  }
  func.func @transform_1(%arg0: i32) -> (i32, i32) {
    %c0_i32 = arith.constant 0 : i32
    %c0_i32_0 = arith.constant 0 : i32
    %c0_i32_1 = arith.constant 0 : i32
    return %c0_i32, %c0_i32_0 : i32, i32
  }
  func.func @transform_2(%arg0: i32) -> (i32, i32) {
    %c0_i32 = arith.constant 0 : i32
    %c0_i32_0 = arith.constant 0 : i32
    return %arg0, %c0_i32 : i32, i32
  }
  func.func @transform_3(%arg0: i32) -> (i32, i32) {
    %c0_i32 = arith.constant 0 : i32
    %c0_i32_0 = arith.constant 0 : i32
    return %arg0, %c0_i32 : i32, i32
  }
  func.func @transform_4(%arg0: i32) -> (i32, i32) {
    %c0_i32 = arith.constant 0 : i32
    %c0_i32_0 = arith.constant 0 : i32
    return %arg0, %c0_i32 : i32, i32
  }
  func.func @transform_5(%arg0: i32) -> (i32, i32) {
    %c0_i32 = arith.constant 0 : i32
    %c0_i32_0 = arith.constant 0 : i32
    return %arg0, %c0_i32 : i32, i32
  }
}

</mosaic_0001>

<llo_original>
// kernel: tpu_custom_call.1
$region0: #{tpu_custom_call.1}
  #allocation0 [shape = 'u32[]', space=smem, size = 0x4, offset = 0x4, fixed_abs, tag = 'smem constant byte address 0x4 - core index']
  #allocation1 [shape = 'u32[144,128]{1,0:T(1,128)}', space=vmem, size = 0x12000, scoped, tag = 'internal scratch']
  %s0 = inlined_call_operand.vmem [shape: bf16[128,32], index: 0, kind: input, shape index: {}]
  %s1 = inlined_call_operand.vmem [shape: f32[4,128], index: 1, kind: input, shape index: {}]
  %s2 = inlined_call_operand.vmem [shape: f32[128,4], index: 2, kind: input, shape index: {}]
  %s3 = inlined_call_operand.vmem [shape: f32[128,128], index: 3, kind: input, shape index: {}]
  %s4 = inlined_call_operand.vmem [shape: bf16[128,128], index: 4, kind: input, shape index: {}]
  %s5 = inlined_call_operand.hbm [shape: f32[128,128], index: 5, kind: output, shape index: {}]
  %s6 = sld [smem:[#allocation0]]
  $region53: #{tpu_custom_call.1} parent=0
    _
  %s8 = ssub.s32 1, %s6
  %s9 = scalar_select 0, %s8, %s6
  $region1: #{tpu_custom_call.1} parent=0
    #allocation2 [shape = 'u8[65536]{0}', space=vmem, size = 0x10000, scoped, tag = 'output window, operand 0']
    #allocation3 [shape = 's32[2]{0}', space=sflag, size = 0x8, scoped, tag = 'scoped memory for tpu_custom_call.1']
    %10 = vsyncpa [#allocation3], 0
    %s11 = scalar_lea.sflag [#allocation3], 1
    %12 = vsyncpa %s11, 0
    loop: start=0, step=1, limit=4
    $region2: #{tpu_custom_call.1} parent=1 // loop_pre_header
      _
    $region3: #{tpu_custom_call.1} parent=1 // loop_header
      %s14 = sphi 0, %s18
      %p15 = scmp.ge.s32.totalorder %s14, 4
      %s22 = sphi 0, %s22
      %s24 = sphi 0, %s22
      %s25 = sphi 0, %s24
      %s39 = sphi 0, %s25
      %s43 = sphi 0, %s43
      %s45 = sphi 0, %s43
      %s46 = sphi 0, %s45
      %s60 = sphi 0, %s46
      %s66 = sphi 0, %s68
      %s69 = sphi 0, %s66
      %s70 = sphi 0, %s69
      %s86 = sphi 0, %s70
      %s92 = sphi 0, %s94
      %s95 = sphi 0, %s92
      %s96 = sphi 0, %s95
      %s112 = sphi 0, %s96
      %s118 = sphi 0, %s120
      %s121 = sphi 0, %s118
      %s122 = sphi 0, %s121
      %s138 = sphi 0, %s122
      %s144 = sphi 0, %s146
      %s147 = sphi 0, %s144
      %s148 = sphi 0, %s147
      %s164 = sphi 0, %s148
    $region4: #{tpu_custom_call.1} parent=1 // loop_header_branch
      %17 = sbr.rel (%p15) target = $region8
    $region5: #{tpu_custom_call.1} parent=1 // loop_body
      %s19 = ssub.s32 %s14, 1
      %s20 = ssub.s32 %s14, 2
      %s21 = sadd.s32 %s14, 1
      %s23 = sadd.s32 %s22, 1
      %p26 = scmp.eq.s32.totalorder %s14, 1
      %p27 = scmp.ne.s32.totalorder %s22, %s24
      %p28 = scmp.eq.s32.totalorder %s14, 0
      %p29 = por %p27, %p28
      %p30 = scmp.ne.s32.totalorder %s22, %s24
      %p31 = scmp.eq.s32.totalorder %s19, 1
      %p32 = por %p30, %p31
      %p33 = scmp.ne.s32.totalorder %s24, %s25
      %p34 = scmp.eq.s32.totalorder %s19, 0
      %p35 = por %p33, %p34
      %p36 = scmp.ne.s32.totalorder %s24, %s25
      %p37 = scmp.eq.s32.totalorder %s20, 1
      %p38 = por %p36, %p37
      %p40 = scmp.ne.s32.totalorder %s25, %s39
      %p41 = scmp.eq.s32.totalorder %s20, 0
      %p42 = por %p40, %p41
      %s44 = sadd.s32 %s43, 1
      %p47 = scmp.eq.s32.totalorder %s14, 1
      %p48 = scmp.ne.s32.totalorder %s43, %s45
      %p49 = scmp.eq.s32.totalorder %s14, 0
      %p50 = por %p48, %p49
      %p51 = scmp.ne.s32.totalorder %s43, %s45
      %p52 = scmp.eq.s32.totalorder %s19, 1
      %p53 = por %p51, %p52
      %p54 = scmp.ne.s32.totalorder %s45, %s46
      %p55 = scmp.eq.s32.totalorder %s19, 0
      %p56 = por %p54, %p55
      %p57 = scmp.ne.s32.totalorder %s45, %s46
      %p58 = scmp.eq.s32.totalorder %s20, 1
      %p59 = por %p57, %p58
      %p61 = scmp.ne.s32.totalorder %s46, %s60
      %p62 = scmp.eq.s32.totalorder %s20, 0
      %p63 = por %p61, %p62
      %s64 = ssub.s32 %s14, %s21
      %p65 = scmp.eq.s32.totalorder %s64, 0
      %s67 = sadd.s32 %s66, 1
      %s68 = scalar_select %p65, %s66, %s67
      %p71 = pneg %p65
      %p72 = scmp.eq.s32.totalorder %s14, 1
      %p73 = por %p71, %p72
      %p74 = scmp.ne.s32.totalorder %s66, %s69
      %p75 = scmp.eq.s32.totalorder %s14, 0
      %p76 = por %p74, %p75
      %p77 = scmp.ne.s32.totalorder %s66, %s69
      %p78 = scmp.eq.s32.totalorder %s19, 1
      %p79 = por %p77, %p78
      %p80 = scmp.ne.s32.totalorder %s69, %s70
      %p81 = scmp.eq.s32.totalorder %s19, 0
      %p82 = por %p80, %p81
      %p83 = scmp.ne.s32.totalorder %s69, %s70
      %p84 = scmp.eq.s32.totalorder %s20, 1
      %p85 = por %p83, %p84
      %p87 = scmp.ne.s32.totalorder %s70, %s86
      %p88 = scmp.eq.s32.totalorder %s20, 0
      %p89 = por %p87, %p88
      %s90 = ssub.s32 %s14, %s21
      %p91 = scmp.eq.s32.totalorder %s90, 0
      %s93 = sadd.s32 %s92, 1
      %s94 = scalar_select %p91, %s92, %s93
      %p97 = pneg %p91
      %p98 = scmp.eq.s32.totalorder %s14, 1
      %p99 = por %p97, %p98
      %p100 = scmp.ne.s32.totalorder %s92, %s95
      %p101 = scmp.eq.s32.totalorder %s14, 0
      %p102 = por %p100, %p101
      %p103 = scmp.ne.s32.totalorder %s92, %s95
      %p104 = scmp.eq.s32.totalorder %s19, 1
      %p105 = por %p103, %p104
      %p106 = scmp.ne.s32.totalorder %s95, %s96
      %p107 = scmp.eq.s32.totalorder %s19, 0
      %p108 = por %p106, %p107
      %p109 = scmp.ne.s32.totalorder %s95, %s96
      %p110 = scmp.eq.s32.totalorder %s20, 1
      %p111 = por %p109, %p110
      %p113 = scmp.ne.s32.totalorder %s96, %s112
      %p114 = scmp.eq.s32.totalorder %s20, 0
      %p115 = por %p113, %p114
      %s116 = ssub.s32 %s14, %s21
      %p117 = scmp.eq.s32.totalorder %s116, 0
      %s119 = sadd.s32 %s118, 1
      %s120 = scalar_select %p117, %s118, %s119
      %p123 = pneg %p117
      %p124 = scmp.eq.s32.totalorder %s14, 1
      %p125 = por %p123, %p124
      %p126 = scmp.ne.s32.totalorder %s118, %s121
      %p127 = scmp.eq.s32.totalorder %s14, 0
      %p128 = por %p126, %p127
      %p129 = scmp.ne.s32.totalorder %s118, %s121
      %p130 = scmp.eq.s32.totalorder %s19, 1
      %p131 = por %p129, %p130
      %p132 = scmp.ne.s32.totalorder %s121, %s122
      %p133 = scmp.eq.s32.totalorder %s19, 0
      %p134 = por %p132, %p133
      %p135 = scmp.ne.s32.totalorder %s121, %s122
      %p136 = scmp.eq.s32.totalorder %s20, 1
      %p137 = por %p135, %p136
      %p139 = scmp.ne.s32.totalorder %s122, %s138
      %p140 = scmp.eq.s32.totalorder %s20, 0
      %p141 = por %p139, %p140
      %s142 = ssub.s32 %s14, %s21
      %p143 = scmp.eq.s32.totalorder %s142, 0
      %s145 = sadd.s32 %s144, 1
      %s146 = scalar_select %p143, %s144, %s145
      %p149 = pneg %p143
      %p150 = scmp.eq.s32.totalorder %s14, 1
      %p151 = por %p149, %p150
      %p152 = scmp.ne.s32.totalorder %s144, %s147
      %p153 = scmp.eq.s32.totalorder %s14, 0
      %p154 = por %p152, %p153
      %p155 = scmp.ne.s32.totalorder %s144, %s147
      %p156 = scmp.eq.s32.totalorder %s19, 1
      %p157 = por %p155, %p156
      %p158 = scmp.ne.s32.totalorder %s147, %s148
      %p159 = scmp.eq.s32.totalorder %s19, 0
      %p160 = por %p158, %p159
      %p161 = scmp.ne.s32.totalorder %s147, %s148
      %p162 = scmp.eq.s32.totalorder %s20, 1
      %p163 = por %p161, %p162
      %p165 = scmp.ne.s32.totalorder %s148, %s164
      %p166 = scmp.eq.s32.totalorder %s20, 0
      %p167 = por %p165, %p166
      %p168 = scmp.le.s32.totalorder 1, %s14
      %p169 = scmp.lt.s32.totalorder %s14, 3
      %p170 = pnand %p168, %p169
      %p171 = pneg %p170
      // Predicated region
      $region9: #{tpu_custom_call.1} parent=5 // pred_check
        _
      $region10: #{tpu_custom_call.1} parent=5 // pred_check_branch
        %173 = sbr.rel (%p170) target = $region12
      $region11: #{tpu_custom_call.1} parent=5 // pred_region
        %s174 = ssub.s32 %s14, 1
        // Predicated region
        $region13: #{tpu_custom_call.1} parent=11 // pred_check
          %p175 = pneg %p35
        $region14: #{tpu_custom_call.1} parent=11 // pred_check_branch
          %177 = sbr.rel (%p175) target = $region16
        $region15: #{tpu_custom_call.1} parent=11 // pred_region
          _
        $region16: #{tpu_custom_call.1} parent=11 // pred_fallthru
          _
        // Predicated region
        $region17: #{tpu_custom_call.1} parent=11 // pred_check
          %p178 = pneg %p56
        $region18: #{tpu_custom_call.1} parent=11 // pred_check_branch
          %180 = sbr.rel (%p178) target = $region20
        $region19: #{tpu_custom_call.1} parent=11 // pred_region
          _
        $region20: #{tpu_custom_call.1} parent=11 // pred_fallthru
          _
      $region12: #{tpu_custom_call.1} parent=5 // pred_fallthru
        _
      %p181 = scmp.lt.s32.totalorder %s14, 2
      // Predicated region
      $region21: #{tpu_custom_call.1} parent=5 // pred_check
        %p182 = pneg %p181
      $region22: #{tpu_custom_call.1} parent=5 // pred_check_branch
        %184 = sbr.rel (%p182) target = $region24
      $region23: #{tpu_custom_call.1} parent=5 // pred_region
        // Predicated region
        $region25: #{tpu_custom_call.1} parent=23 // pred_check
          %p185 = pneg %p76
        $region26: #{tpu_custom_call.1} parent=23 // pred_check_branch
          %187 = sbr.rel (%p185) target = $region28
        $region27: #{tpu_custom_call.1} parent=23 // pred_region
          %s188 = smul.u32 8, %s14
          %p189 = scmp.lt.s32.totalorder %s188, 15
          %s190 = scalar_select %p189, %s188, 15
          %s191 = smul.addr %s190, 8
          %s192 = scalar_lea.vmem %s2, %s191
          %s193 = smul.u32 8, %s14
        $region28: #{tpu_custom_call.1} parent=23 // pred_fallthru
          _
        // Predicated region
        $region29: #{tpu_custom_call.1} parent=23 // pred_check
          %p194 = pneg %p102
        $region30: #{tpu_custom_call.1} parent=23 // pred_check_branch
          %196 = sbr.rel (%p194) target = $region32
        $region31: #{tpu_custom_call.1} parent=23 // pred_region
          %s197 = smul.u32 8, %s14
          %p198 = scmp.lt.s32.totalorder %s197, 15
          %s199 = scalar_select %p198, %s197, 15
          %s200 = smul.addr %s199, 8
          %s201 = scalar_lea.vmem %s3, %s200
          %s202 = smul.u32 8, %s14
        $region32: #{tpu_custom_call.1} parent=23 // pred_fallthru
          _
        // Predicated region
        $region33: #{tpu_custom_call.1} parent=23 // pred_check
          %p203 = pneg %p128
        $region34: #{tpu_custom_call.1} parent=23 // pred_check_branch
          %205 = sbr.rel (%p203) target = $region36
        $region35: #{tpu_custom_call.1} parent=23 // pred_region
          %s206 = smul.u32 8, %s14
          %p207 = scmp.lt.s32.totalorder %s206, 15
          %s208 = scalar_select %p207, %s206, 15
          %s209 = smul.addr %s208, 4
          %s210 = scalar_lea.vmem %s4, %s209
          %s211 = smul.u32 8, %s14
        $region36: #{tpu_custom_call.1} parent=23 // pred_fallthru
          _
      $region24: #{tpu_custom_call.1} parent=5 // pred_fallthru
        _
      %p212 = scmp.le.s32.totalorder 1, %s14
      %p213 = scmp.lt.s32.totalorder %s14, 3
      %p214 = pnand %p212, %p213
      %p215 = pneg %p214
      // Predicated region
      $region37: #{tpu_custom_call.1} parent=5 // pred_check
        _
      $region38: #{tpu_custom_call.1} parent=5 // pred_check_branch
        %217 = sbr.rel (%p214) target = $region40
      $region39: #{tpu_custom_call.1} parent=5 // pred_region
        %s218 = ssub.s32 %s14, 1
        %p219 = pneg %p35
        %p220 = pneg %p32
        %p221 = pneg %p56
        %p222 = pneg %p53
        %s223 = smul.u32 8, %s19
        %p224 = scmp.lt.s32.totalorder %s223, 15
        %s225 = scalar_select %p224, %s223, 15
        %s226 = smul.addr %s225, 8
        %s227 = scalar_lea.vmem %s2, %s226
        %p228 = pneg %p82
        %p229 = pneg %p79
        %s230 = smul.u32 8, %s19
        %p231 = scmp.lt.s32.totalorder %s230, 15
        %s232 = scalar_select %p231, %s230, 15
        %s233 = smul.addr %s232, 8
        %s234 = scalar_lea.vmem %s3, %s233
        %p235 = pneg %p108
        %p236 = pneg %p105
        %s237 = smul.u32 8, %s19
        %p238 = scmp.lt.s32.totalorder %s237, 15
        %s239 = scalar_select %p238, %s237, 15
        %s240 = smul.addr %s239, 4
        %s241 = scalar_lea.vmem %s4, %s240
        %p242 = pneg %p134
        %p243 = pneg %p131
        %p244 = pneg %p160
        %p245 = pneg %p157
        %s246 = sand.u32 %s147, 1
        %s247 = scalar_lea.sflag [#allocation3], %s246
        %s248 = sand.u32 %s147, 1
        %s249 = smul.addr %s248, 64
        %s250 = scalar_lea.vmem [#allocation2], %s249
        %s251 = smul.u32 8, %s19
        %p252 = scmp.lt.s32.totalorder %s251, 15
        %s253 = scalar_select %p252, %s251, 15
        %s254 = smul.addr %s253, 8
        %s255 = scalar_lea.vmem %s2, %s254
        %s256 = smul.u32 8, %s19
        %s257 = smul.u32 8, %s19
        %p258 = scmp.lt.s32.totalorder %s257, 15
        %s259 = scalar_select %p258, %s257, 15
        %s260 = smul.addr %s259, 8
        %s261 = scalar_lea.vmem %s3, %s260
        %s262 = smul.u32 8, %s19
        %s263 = smul.u32 8, %s19
        %p264 = scmp.lt.s32.totalorder %s263, 15
        %s265 = scalar_select %p264, %s263, 15
        %s266 = smul.addr %s265, 4
        %s267 = scalar_lea.vmem %s4, %s266
        %s268 = smul.u32 8, %s19
        %s269 = smul.u32 8, %s19
        %v273 = vld [vmem:[%s267] sm:$0xf]
        %v274 = vld [vmem:[%s267 + $0x4] sm:$0xf]
        %v275 = vld [vmem:[%s267 + $0x8] sm:$0xf]
        %v276 = vld [vmem:[%s267 + $0xc] sm:$0xf]
        %v277 = vld [vmem:[%s267 + $0x10] sm:$0xf]
        %v278 = vld [vmem:[%s267 + $0x14] sm:$0xf]
        %v279 = vld [vmem:[%s267 + $0x18] sm:$0xf]
        %v280 = vld [vmem:[%s267 + $0x1c] sm:$0xf]
        %vm281 = vcmp.gt.bf16.partialorder %v273, 0
        %vm282 = vcmp.gt.bf16.partialorder %v274, 0
        %vm283 = vcmp.gt.bf16.partialorder %v275, 0
        %vm284 = vcmp.gt.bf16.partialorder %v276, 0
        %vm285 = vcmp.gt.bf16.partialorder %v277, 0
        %vm286 = vcmp.gt.bf16.partialorder %v278, 0
        %vm287 = vcmp.gt.bf16.partialorder %v279, 0
        %vm288 = vcmp.gt.bf16.partialorder %v280, 0
        %v289 = vunpack.c.l.bf16 %v273
        %v290 = vunpack.c.l.bf16 %v274
        %v291 = vunpack.c.l.bf16 %v275
        %v292 = vunpack.c.l.bf16 %v276
        %v293 = vunpack.c.l.bf16 %v277
        %v294 = vunpack.c.l.bf16 %v278
        %v295 = vunpack.c.l.bf16 %v279
        %v296 = vunpack.c.l.bf16 %v280
        %v297 = vld [vmem:[%s0] sm:$0xf]
        %v298 = vld [vmem:[%s0 + $0x4] sm:$0xf]
        %v299 = vld [vmem:[%s0 + $0x8] sm:$0xf]
        %v300 = vld [vmem:[%s0 + $0xc] sm:$0xf]
        %v301 = vld [vmem:[%s0 + $0x10] sm:$0xf]
        %v302 = vld [vmem:[%s0 + $0x14] sm:$0xf]
        %v303 = vld [vmem:[%s0 + $0x18] sm:$0xf]
        %v304 = vld [vmem:[%s0 + $0x1c] sm:$0xf]
        %v305 = vld [vmem:[%s0 + $0x20] sm:$0xf]
        %v306 = vld [vmem:[%s0 + $0x24] sm:$0xf]
        %v307 = vld [vmem:[%s0 + $0x28] sm:$0xf]
        %v308 = vld [vmem:[%s0 + $0x2c] sm:$0xf]
        %v309 = vld [vmem:[%s0 + $0x30] sm:$0xf]
        %v310 = vld [vmem:[%s0 + $0x34] sm:$0xf]
        %v311 = vld [vmem:[%s0 + $0x38] sm:$0xf]
        %v312 = vld [vmem:[%s0 + $0x3c] sm:$0xf]
        %v313 = vld [vmem:[%s1] sm:$0xf]
        %v314 = vld [vmem:[%s255] sm:$0xff]
        %v315 = vld [vmem:[%s255 + $0x8] sm:$0xff]
        %v316 = vld [vmem:[%s255 + $0x10] sm:$0xff]
        %v317 = vld [vmem:[%s255 + $0x18] sm:$0xff]
        %v318 = vld [vmem:[%s255 + $0x20] sm:$0xff]
        %v319 = vld [vmem:[%s255 + $0x28] sm:$0xff]
        %v320 = vld [vmem:[%s255 + $0x30] sm:$0xff]
        %v321 = vld [vmem:[%s255 + $0x38] sm:$0xff]
        %v322 = vld [vmem:[%s261] sm:$0xff]
        %v323 = vld [vmem:[%s261 + $0x8] sm:$0xff]
        %v324 = vld [vmem:[%s261 + $0x10] sm:$0xff]
        %v325 = vld [vmem:[%s261 + $0x18] sm:$0xff]
        %v326 = vld [vmem:[%s261 + $0x20] sm:$0xff]
        %v327 = vld [vmem:[%s261 + $0x28] sm:$0xff]
        %v328 = vld [vmem:[%s261 + $0x30] sm:$0xff]
        %v329 = vld [vmem:[%s261 + $0x38] sm:$0xff]
        %v330 = vlaneseq
        %v331 = vshrl.u32 %v330, 7
        %v332 = vsub.s32 0, %v331
        %v333 = vrot.slane %v313, %v332
        %335 = vset.pattern.permute.xlu0 0
        %336 = vperm.xlu0 %335, %v314
        %v337 = vpop.permute.xlu0 %336
        %340 = vset.pattern.permute.xlu0 0
        %341 = vperm.xlu0 %340, %v315
        %v342 = vpop.permute.xlu0 %341
        %345 = vset.pattern.permute.xlu0 0
        %346 = vperm.xlu0 %345, %v316
        %v347 = vpop.permute.xlu0 %346
        %350 = vset.pattern.permute.xlu0 0
        %351 = vperm.xlu0 %350, %v317
        %v352 = vpop.permute.xlu0 %351
        %355 = vset.pattern.permute.xlu0 0
        %356 = vperm.xlu0 %355, %v318
        %v357 = vpop.permute.xlu0 %356
        %360 = vset.pattern.permute.xlu0 0
        %361 = vperm.xlu0 %360, %v319
        %v362 = vpop.permute.xlu0 %361
        %365 = vset.pattern.permute.xlu0 0
        %366 = vperm.xlu0 %365, %v320
        %v367 = vpop.permute.xlu0 %366
        %370 = vset.pattern.permute.xlu0 0
        %371 = vperm.xlu0 %370, %v321
        %v372 = vpop.permute.xlu0 %371
        %v374 = vadd.f32 %v333, %v337
        %v375 = vadd.f32 %v333, %v342
        %v376 = vadd.f32 %v333, %v347
        %v377 = vadd.f32 %v333, %v352
        %v378 = vadd.f32 %v333, %v357
        %v379 = vadd.f32 %v333, %v362
        %v380 = vadd.f32 %v333, %v367
        %v381 = vadd.f32 %v333, %v372
        %v382 = vmul.f32 %v289, %v374
        %v383 = vmul.f32 %v290, %v375
        %v384 = vmul.f32 %v291, %v376
        %v385 = vmul.f32 %v292, %v377
        %v386 = vmul.f32 %v293, %v378
        %v387 = vmul.f32 %v294, %v379
        %v388 = vmul.f32 %v295, %v380
        %v389 = vmul.f32 %v296, %v381
        %v390 = vmul.f32 %v382, 0.2
        %v391 = vmul.f32 %v383, 0.2
        %v392 = vmul.f32 %v384, 0.2
        %v393 = vmul.f32 %v385, 0.2
        %v394 = vmul.f32 %v386, 0.2
        %v395 = vmul.f32 %v387, 0.2
        %v396 = vmul.f32 %v388, 0.2
        %v397 = vmul.f32 %v389, 0.2
        %v398 = vmax.f32 %v382, %v390
        %v399 = vmax.f32 %v383, %v391
        %v400 = vmax.f32 %v384, %v392
        %v401 = vmax.f32 %v385, %v393
        %v402 = vmax.f32 %v386, %v394
        %v403 = vmax.f32 %v387, %v395
        %v404 = vmax.f32 %v388, %v396
        %v405 = vmax.f32 %v389, %v397
        %v406 = vsel %vm281, 65537, 0
        %v407 = vsel %vm282, 65537, 0
        %v408 = vsel %vm283, 65537, 0
        %v409 = vsel %vm284, 65537, 0
        %v410 = vsel %vm285, 65537, 0
        %v411 = vsel %vm286, 65537, 0
        %v412 = vsel %vm287, 65537, 0
        %v413 = vsel %vm288, 65537, 0
        %v414 = vunpack.c.l.b16 %v406
        %v415 = vunpack.c.l.b16 %v407
        %v416 = vunpack.c.l.b16 %v408
        %v417 = vunpack.c.l.b16 %v409
        %v418 = vunpack.c.l.b16 %v410
        %v419 = vunpack.c.l.b16 %v411
        %v420 = vunpack.c.l.b16 %v412
        %v421 = vunpack.c.l.b16 %v413
        %vm422 = vcmp.ne.s32.totalorder %v414, 0
        %vm423 = vcmp.ne.s32.totalorder %v415, 0
        %vm424 = vcmp.ne.s32.totalorder %v416, 0
        %vm425 = vcmp.ne.s32.totalorder %v417, 0
        %vm426 = vcmp.ne.s32.totalorder %v418, 0
        %vm427 = vcmp.ne.s32.totalorder %v419, 0
        %vm428 = vcmp.ne.s32.totalorder %v420, 0
        %vm429 = vcmp.ne.s32.totalorder %v421, 0
        %v430 = vsel %vm422, %v398, -1e+30
        %v431 = vsel %vm423, %v399, -1e+30
        %v432 = vsel %vm424, %v400, -1e+30
        %v433 = vsel %vm425, %v401, -1e+30
        %v434 = vsel %vm426, %v402, -1e+30
        %v435 = vsel %vm427, %v403, -1e+30
        %v436 = vsel %vm428, %v404, -1e+30
        %v437 = vsel %vm429, %v405, -1e+30
        %438 = vmax.xlane.f32.xlu0 %v430
        %v439 = vpop.xlane.xlu0 %438
        %440 = vmax.xlane.f32.xlu0 %v431
        %v441 = vpop.xlane.xlu0 %440
        %442 = vmax.xlane.f32.xlu0 %v432
        %v443 = vpop.xlane.xlu0 %442
        %444 = vmax.xlane.f32.xlu0 %v433
        %v445 = vpop.xlane.xlu0 %444
        %446 = vmax.xlane.f32.xlu0 %v434
        %v447 = vpop.xlane.xlu0 %446
        %448 = vmax.xlane.f32.xlu0 %v435
        %v449 = vpop.xlane.xlu0 %448
        %450 = vmax.xlane.f32.xlu0 %v436
        %v451 = vpop.xlane.xlu0 %450
        %452 = vmax.xlane.f32.xlu0 %v437
        %v453 = vpop.xlane.xlu0 %452
        %v454 = vsub.f32 %v430, %v439
        %v455 = vsub.f32 %v431, %v441
        %v456 = vsub.f32 %v432, %v443
        %v457 = vsub.f32 %v433, %v445
        %v458 = vsub.f32 %v434, %v447
        %v459 = vsub.f32 %v435, %v449
        %v460 = vsub.f32 %v436, %v451
        %v461 = vsub.f32 %v437, %v453
        %v462 = vmul.f32 %v454, 1.442695
        %v463 = vpow.pop %v462
        %v464 = vmul.f32 %v455, 1.442695
        %v465 = vpow.pop %v464
        %v466 = vmul.f32 %v456, 1.442695
        %v467 = vpow.pop %v466
        %v468 = vmul.f32 %v457, 1.442695
        %v469 = vpow.pop %v468
        %v470 = vmul.f32 %v458, 1.442695
        %v471 = vpow.pop %v470
        %v472 = vmul.f32 %v459, 1.442695
        %v473 = vpow.pop %v472
        %v474 = vmul.f32 %v460, 1.442695
        %v475 = vpow.pop %v474
        %v476 = vmul.f32 %v461, 1.442695
        %v477 = vpow.pop %v476
        %478 = vadd.xlane.f32.xlu0 %v463
        %v479 = vpop.xlane.xlu0 %478
        %480 = vadd.xlane.f32.xlu0 %v465
        %v481 = vpop.xlane.xlu0 %480
        %482 = vadd.xlane.f32.xlu0 %v467
        %v483 = vpop.xlane.xlu0 %482
        %484 = vadd.xlane.f32.xlu0 %v469
        %v485 = vpop.xlane.xlu0 %484
        %486 = vadd.xlane.f32.xlu0 %v471
        %v487 = vpop.xlane.xlu0 %486
        %488 = vadd.xlane.f32.xlu0 %v473
        %v489 = vpop.xlane.xlu0 %488
        %490 = vadd.xlane.f32.xlu0 %v475
        %v491 = vpop.xlane.xlu0 %490
        %492 = vadd.xlane.f32.xlu0 %v477
        %v493 = vpop.xlane.xlu0 %492
        %v494 = vrcp.pop %v479
        %v495 = vrcp.pop %v481
        %v496 = vrcp.pop %v483
        %v497 = vrcp.pop %v485
        %v498 = vrcp.pop %v487
        %v499 = vrcp.pop %v489
        %v500 = vrcp.pop %v491
        %v501 = vrcp.pop %v493
        %v502 = vmul.f32 %v463, %v494
        %v503 = vmul.f32 %v465, %v495
        %v504 = vmul.f32 %v467, %v496
        %v505 = vmul.f32 %v469, %v497
        %v506 = vmul.f32 %v471, %v498
        %v507 = vmul.f32 %v473, %v499
        %v508 = vmul.f32 %v475, %v500
        %v509 = vmul.f32 %v477, %v501
        %v510 = vpack.c.bf16 %v503, %v502
        %v511 = vpack.c.bf16 %v505, %v504
        %v512 = vpack.c.bf16 %v507, %v506
        %v513 = vpack.c.bf16 %v509, %v508
        %v530 = vunpack.c.l.b16 %v297
        %v531 = vunpack.c.l.b16 %v298
        %v532 = vunpack.c.l.b16 %v299
        %v533 = vunpack.c.l.b16 %v300
        %v534 = vunpack.c.l.b16 %v301
        %v535 = vunpack.c.l.b16 %v302
        %v536 = vunpack.c.l.b16 %v303
        %v537 = vunpack.c.l.b16 %v304
        %v538 = vunpack.c.l.b16 %v305
        %v539 = vunpack.c.l.b16 %v306
        %v540 = vunpack.c.l.b16 %v307
        %v541 = vunpack.c.l.b16 %v308
        %v542 = vunpack.c.l.b16 %v309
        %v543 = vunpack.c.l.b16 %v310
        %v544 = vunpack.c.l.b16 %v311
        %v545 = vunpack.c.l.b16 %v312
        %v546 = vpack.c.b16 %v531, %v530
        %v547 = vpack.c.b16 %v533, %v532
        %v548 = vpack.c.b16 %v535, %v534
        %v549 = vpack.c.b16 %v537, %v536
        %v550 = vpack.c.b16 %v539, %v538
        %v551 = vpack.c.b16 %v541, %v540
        %v552 = vpack.c.b16 %v543, %v542
        %v553 = vpack.c.b16 %v545, %v544
        %562 = vmatprep.subr.bf16.mxu0 0
        %563 = vmatpush1.bf16.msra.mxu0 %v553
        %564 = vmatprep.subr.bf16.mxu0 0
        %565 = vmatpush1.bf16.msra.mxu0 %v552
        %566 = vmatprep.subr.bf16.mxu0 0
        %567 = vmatpush1.bf16.msra.mxu0 %v551
        %568 = vmatprep.subr.bf16.mxu0 0
        %569 = vmatpush1.bf16.msra.mxu0 %v550
        %570 = vmatprep.subr.bf16.mxu0 0
        %571 = vmatpush1.bf16.msra.mxu0 %v549
        %572 = vmatprep.subr.bf16.mxu0 0
        %573 = vmatpush1.bf16.msra.mxu0 %v548
        %574 = vmatprep.subr.bf16.mxu0 0
        %575 = vmatpush1.bf16.msra.mxu0 %v547
        %576 = vmatprep.subr.bf16.mxu0 0
        %577 = vmatpush1.bf16.msra.mxu0 %v546
        %578 = vmatprep.subr.bf16.mxu0 0
        %579 = vmatpush2.bf16.msra.mxu0 0
        %580 = vmatprep.subr.bf16.mxu0 0
        %581 = vmatpush2.bf16.msra.mxu0 0
        %582 = vmatprep.subr.bf16.mxu0 0
        %583 = vmatpush2.bf16.msra.mxu0 0
        %584 = vmatprep.subr.bf16.mxu0 0
        %585 = vmatpush2.bf16.msra.mxu0 0
        %586 = vmatprep.subr.bf16.mxu0 0
        %587 = vmatpush2.bf16.msra.mxu0 0
        %588 = vmatprep.subr.bf16.mxu0 0
        %589 = vmatpush2.bf16.msra.mxu0 0
        %590 = vmatprep.subr.bf16.mxu0 0
        %591 = vmatpush2.bf16.msra.mxu0 0
        %592 = vmatprep.subr.bf16.mxu0 0
        %593 = vmatpush2.bf16.msra.mxu0 0
        %594 = vmatprep.mubr.bf16.mxu0 0
        %595 = vmatmul.mubr.bf16.gmra.mxu0 %v510
        %v596 = vpop.f32.mrf.mxu0
        %v597 = vadd.f32 0.0, %v596
        %v598 = vpop.f32.mrf.mxu0
        %v599 = vpop.f32.mrf.mxu0
        %v600 = vadd.f32 0.0, %v599
        %v601 = vpop.f32.mrf.mxu0
        %602 = vmatprep.mubr.bf16.mxu0 0
        %603 = vmatmul.mubr.bf16.gmra.mxu0 %v511
        %v604 = vpop.f32.mrf.mxu0
        %v605 = vadd.f32 0.0, %v604
        %v606 = vpop.f32.mrf.mxu0
        %v607 = vpop.f32.mrf.mxu0
        %v608 = vadd.f32 0.0, %v607
        %v609 = vpop.f32.mrf.mxu0
        %610 = vmatprep.mubr.bf16.mxu0 0
        %611 = vmatmul.mubr.bf16.gmra.mxu0 %v512
        %v612 = vpop.f32.mrf.mxu0
        %v613 = vadd.f32 0.0, %v612
        %v614 = vpop.f32.mrf.mxu0
        %v615 = vpop.f32.mrf.mxu0
        %v616 = vadd.f32 0.0, %v615
        %v617 = vpop.f32.mrf.mxu0
        %618 = vmatprep.mubr.bf16.mxu0 0
        %619 = vmatmul.mubr.bf16.gmra.mxu0 %v513
        %v620 = vpop.f32.mrf.mxu0
        %v621 = vadd.f32 0.0, %v620
        %v622 = vpop.f32.mrf.mxu0
        %v623 = vpop.f32.mrf.mxu0
        %v624 = vadd.f32 0.0, %v623
        %v625 = vpop.f32.mrf.mxu0
        %626 = vdwg.mxu0
        %vm627 = vcmp.gt.f32.partialorder %v597, 0.0
        %vm628 = vcmp.gt.f32.partialorder %v600, 0.0
        %vm629 = vcmp.gt.f32.partialorder %v605, 0.0
        %vm630 = vcmp.gt.f32.partialorder %v608, 0.0
        %vm631 = vcmp.gt.f32.partialorder %v613, 0.0
        %vm632 = vcmp.gt.f32.partialorder %v616, 0.0
        %vm633 = vcmp.gt.f32.partialorder %v621, 0.0
        %vm634 = vcmp.gt.f32.partialorder %v624, 0.0
        %v635 = vmul.f32 %v597, 1.442695
        %v636 = vpow.pop %v635
        %v637 = vmul.f32 %v600, 1.442695
        %v638 = vpow.pop %v637
        %v639 = vmul.f32 %v605, 1.442695
        %v640 = vpow.pop %v639
        %v641 = vmul.f32 %v608, 1.442695
        %v642 = vpow.pop %v641
        %v643 = vmul.f32 %v613, 1.442695
        %v644 = vpow.pop %v643
        %v645 = vmul.f32 %v616, 1.442695
        %v646 = vpow.pop %v645
        %v647 = vmul.f32 %v621, 1.442695
        %v648 = vpow.pop %v647
        %v649 = vmul.f32 %v624, 1.442695
        %v650 = vpow.pop %v649
        %v651 = vsub.f32 %v636, 1.0
        %v652 = vsub.f32 %v638, 1.0
        %v653 = vsub.f32 %v640, 1.0
        %v654 = vsub.f32 %v642, 1.0
        %v655 = vsub.f32 %v644, 1.0
        %v656 = vsub.f32 %v646, 1.0
        %v657 = vsub.f32 %v648, 1.0
        %v658 = vsub.f32 %v650, 1.0
        %v659 = vsel %vm627, %v597, %v651
        %v660 = vsel %vm628, %v600, %v652
        %v661 = vsel %vm629, %v605, %v653
        %v662 = vsel %vm630, %v608, %v654
        %v663 = vsel %vm631, %v613, %v655
        %v664 = vsel %vm632, %v616, %v656
        %v665 = vsel %vm633, %v621, %v657
        %v666 = vsel %vm634, %v624, %v658
        %v667 = vlaneseq
        %v668 = vshrl.u32 %v667, 7
        %v669 = vsub.s32 1, %v668
        %v670 = vrot.slane %v313, %v669
        %671 = vset.pattern.permute.xlu0 1
        %672 = vperm.xlu0 %671, %v314
        %v673 = vpop.permute.xlu0 %672
        %675 = vset.pattern.permute.xlu0 1
        %676 = vperm.xlu0 %675, %v315
        %v677 = vpop.permute.xlu0 %676
        %679 = vset.pattern.permute.xlu0 1
        %680 = vperm.xlu0 %679, %v316
        %v681 = vpop.permute.xlu0 %680
        %683 = vset.pattern.permute.xlu0 1
        %684 = vperm.xlu0 %683, %v317
        %v685 = vpop.permute.xlu0 %684
        %687 = vset.pattern.permute.xlu0 1
        %688 = vperm.xlu0 %687, %v318
        %v689 = vpop.permute.xlu0 %688
        %691 = vset.pattern.permute.xlu0 1
        %692 = vperm.xlu0 %691, %v319
        %v693 = vpop.permute.xlu0 %692
        %695 = vset.pattern.permute.xlu0 1
        %696 = vperm.xlu0 %695, %v320
        %v697 = vpop.permute.xlu0 %696
        %699 = vset.pattern.permute.xlu0 1
        %700 = vperm.xlu0 %699, %v321
        %v701 = vpop.permute.xlu0 %700
        %v703 = vadd.f32 %v670, %v673
        %v704 = vadd.f32 %v670, %v677
        %v705 = vadd.f32 %v670, %v681
        %v706 = vadd.f32 %v670, %v685
        %v707 = vadd.f32 %v670, %v689
        %v708 = vadd.f32 %v670, %v693
        %v709 = vadd.f32 %v670, %v697
        %v710 = vadd.f32 %v670, %v701
        %v711 = vmul.f32 %v289, %v703
        %v712 = vmul.f32 %v290, %v704
        %v713 = vmul.f32 %v291, %v705
        %v714 = vmul.f32 %v292, %v706
        %v715 = vmul.f32 %v293, %v707
        %v716 = vmul.f32 %v294, %v708
        %v717 = vmul.f32 %v295, %v709
        %v718 = vmul.f32 %v296, %v710
        %v719 = vmul.f32 %v711, 0.2
        %v720 = vmul.f32 %v712, 0.2
        %v721 = vmul.f32 %v713, 0.2
        %v722 = vmul.f32 %v714, 0.2
        %v723 = vmul.f32 %v715, 0.2
        %v724 = vmul.f32 %v716, 0.2
        %v725 = vmul.f32 %v717, 0.2
        %v726 = vmul.f32 %v718, 0.2
        %v727 = vmax.f32 %v711, %v719
        %v728 = vmax.f32 %v712, %v720
        %v729 = vmax.f32 %v713, %v721
        %v730 = vmax.f32 %v714, %v722
        %v731 = vmax.f32 %v715, %v723
        %v732 = vmax.f32 %v716, %v724
        %v733 = vmax.f32 %v717, %v725
        %v734 = vmax.f32 %v718, %v726
        %v735 = vsel %vm422, %v727, -1e+30
        %v736 = vsel %vm423, %v728, -1e+30
        %v737 = vsel %vm424, %v729, -1e+30
        %v738 = vsel %vm425, %v730, -1e+30
        %v739 = vsel %vm426, %v731, -1e+30
        %v740 = vsel %vm427, %v732, -1e+30
        %v741 = vsel %vm428, %v733, -1e+30
        %v742 = vsel %vm429, %v734, -1e+30
        %743 = vmax.xlane.f32.xlu0 %v735
        %v744 = vpop.xlane.xlu0 %743
        %745 = vmax.xlane.f32.xlu0 %v736
        %v746 = vpop.xlane.xlu0 %745
        %747 = vmax.xlane.f32.xlu0 %v737
        %v748 = vpop.xlane.xlu0 %747
        %749 = vmax.xlane.f32.xlu0 %v738
        %v750 = vpop.xlane.xlu0 %749
        %751 = vmax.xlane.f32.xlu0 %v739
        %v752 = vpop.xlane.xlu0 %751
        %753 = vmax.xlane.f32.xlu0 %v740
        %v754 = vpop.xlane.xlu0 %753
        %755 = vmax.xlane.f32.xlu0 %v741
        %v756 = vpop.xlane.xlu0 %755
        %757 = vmax.xlane.f32.xlu0 %v742
        %v758 = vpop.xlane.xlu0 %757
        %v759 = vsub.f32 %v735, %v744
        %v760 = vsub.f32 %v736, %v746
        %v761 = vsub.f32 %v737, %v748
        %v762 = vsub.f32 %v738, %v750
        %v763 = vsub.f32 %v739, %v752
        %v764 = vsub.f32 %v740, %v754
        %v765 = vsub.f32 %v741, %v756
        %v766 = vsub.f32 %v742, %v758
        %v767 = vmul.f32 %v759, 1.442695
        %v768 = vpow.pop %v767
        %v769 = vmul.f32 %v760, 1.442695
        %v770 = vpow.pop %v769
        %v771 = vmul.f32 %v761, 1.442695
        %v772 = vpow.pop %v771
        %v773 = vmul.f32 %v762, 1.442695
        %v774 = vpow.pop %v773
        %v775 = vmul.f32 %v763, 1.442695
        %v776 = vpow.pop %v775
        %v777 = vmul.f32 %v764, 1.442695
        %v778 = vpow.pop %v777
        %v779 = vmul.f32 %v765, 1.442695
        %v780 = vpow.pop %v779
        %v781 = vmul.f32 %v766, 1.442695
        %v782 = vpow.pop %v781
        %783 = vadd.xlane.f32.xlu0 %v768
        %v784 = vpop.xlane.xlu0 %783
        %785 = vadd.xlane.f32.xlu0 %v770
        %v786 = vpop.xlane.xlu0 %785
        %787 = vadd.xlane.f32.xlu0 %v772
        %v788 = vpop.xlane.xlu0 %787
        %789 = vadd.xlane.f32.xlu0 %v774
        %v790 = vpop.xlane.xlu0 %789
        %791 = vadd.xlane.f32.xlu0 %v776
        %v792 = vpop.xlane.xlu0 %791
        %793 = vadd.xlane.f32.xlu0 %v778
        %v794 = vpop.xlane.xlu0 %793
        %795 = vadd.xlane.f32.xlu0 %v780
        %v796 = vpop.xlane.xlu0 %795
        %797 = vadd.xlane.f32.xlu0 %v782
        %v798 = vpop.xlane.xlu0 %797
        %v799 = vrcp.pop %v784
        %v800 = vrcp.pop %v786
        %v801 = vrcp.pop %v788
        %v802 = vrcp.pop %v790
        %v803 = vrcp.pop %v792
        %v804 = vrcp.pop %v794
        %v805 = vrcp.pop %v796
        %v806 = vrcp.pop %v798
        %v807 = vmul.f32 %v768, %v799
        %v808 = vmul.f32 %v770, %v800
        %v809 = vmul.f32 %v772, %v801
        %v810 = vmul.f32 %v774, %v802
        %v811 = vmul.f32 %v776, %v803
        %v812 = vmul.f32 %v778, %v804
        %v813 = vmul.f32 %v780, %v805
        %v814 = vmul.f32 %v782, %v806
        %v815 = vpack.c.bf16 %v808, %v807
        %v816 = vpack.c.bf16 %v810, %v809
        %v817 = vpack.c.bf16 %v812, %v811
        %v818 = vpack.c.bf16 %v814, %v813
        %819 = vrot.lane.b32.xlu0 %v546, 120
        %v820 = vpop.permute.xlu0 %819
        %821 = vrot.lane.b32.xlu0 %v547, 120
        %v822 = vpop.permute.xlu0 %821
        %823 = vrot.lane.b32.xlu0 %v548, 120
        %v824 = vpop.permute.xlu0 %823
        %825 = vrot.lane.b32.xlu0 %v549, 120
        %v826 = vpop.permute.xlu0 %825
        %827 = vrot.lane.b32.xlu0 %v550, 120
        %v828 = vpop.permute.xlu0 %827
        %829 = vrot.lane.b32.xlu0 %v551, 120
        %v830 = vpop.permute.xlu0 %829
        %831 = vrot.lane.b32.xlu0 %v552, 120
        %v832 = vpop.permute.xlu0 %831
        %833 = vrot.lane.b32.xlu0 %v553, 120
        %v834 = vpop.permute.xlu0 %833
        %843 = vmatprep.subr.bf16.mxu0 0
        %844 = vmatpush1.bf16.msra.mxu0 %v834
        %845 = vmatprep.subr.bf16.mxu0 0
        %846 = vmatpush1.bf16.msra.mxu0 %v832
        %847 = vmatprep.subr.bf16.mxu0 0
        %848 = vmatpush1.bf16.msra.mxu0 %v830
        %849 = vmatprep.subr.bf16.mxu0 0
        %850 = vmatpush1.bf16.msra.mxu0 %v828
        %851 = vmatprep.subr.bf16.mxu0 0
        %852 = vmatpush1.bf16.msra.mxu0 %v826
        %853 = vmatprep.subr.bf16.mxu0 0
        %854 = vmatpush1.bf16.msra.mxu0 %v824
        %855 = vmatprep.subr.bf16.mxu0 0
        %856 = vmatpush1.bf16.msra.mxu0 %v822
        %857 = vmatprep.subr.bf16.mxu0 0
        %858 = vmatpush1.bf16.msra.mxu0 %v820
        %859 = vmatprep.subr.bf16.mxu0 0
        %860 = vmatpush2.bf16.msra.mxu0 0
        %861 = vmatprep.subr.bf16.mxu0 0
        %862 = vmatpush2.bf16.msra.mxu0 0
        %863 = vmatprep.subr.bf16.mxu0 0
        %864 = vmatpush2.bf16.msra.mxu0 0
        %865 = vmatprep.subr.bf16.mxu0 0
        %866 = vmatpush2.bf16.msra.mxu0 0
        %867 = vmatprep.subr.bf16.mxu0 0
        %868 = vmatpush2.bf16.msra.mxu0 0
        %869 = vmatprep.subr.bf16.mxu0 0
        %870 = vmatpush2.bf16.msra.mxu0 0
        %871 = vmatprep.subr.bf16.mxu0 0
        %872 = vmatpush2.bf16.msra.mxu0 0
        %873 = vmatprep.subr.bf16.mxu0 0
        %874 = vmatpush2.bf16.msra.mxu0 0
        %875 = vmatprep.mubr.bf16.mxu0 0
        %876 = vmatmul.mubr.bf16.gmra.mxu0 %v815
        %v877 = vpop.f32.mrf.mxu0
        %v878 = vadd.f32 0.0, %v877
        %v879 = vpop.f32.mrf.mxu0
        %v880 = vpop.f32.mrf.mxu0
        %v881 = vadd.f32 0.0, %v880
        %v882 = vpop.f32.mrf.mxu0
        %883 = vmatprep.mubr.bf16.mxu0 0
        %884 = vmatmul.mubr.bf16.gmra.mxu0 %v816
        %v885 = vpop.f32.mrf.mxu0
        %v886 = vadd.f32 0.0, %v885
        %v887 = vpop.f32.mrf.mxu0
        %v888 = vpop.f32.mrf.mxu0
        %v889 = vadd.f32 0.0, %v888
        %v890 = vpop.f32.mrf.mxu0
        %891 = vmatprep.mubr.bf16.mxu0 0
        %892 = vmatmul.mubr.bf16.gmra.mxu0 %v817
        %v893 = vpop.f32.mrf.mxu0
        %v894 = vadd.f32 0.0, %v893
        %v895 = vpop.f32.mrf.mxu0
        %v896 = vpop.f32.mrf.mxu0
        %v897 = vadd.f32 0.0, %v896
        %v898 = vpop.f32.mrf.mxu0
        %899 = vmatprep.mubr.bf16.mxu0 0
        %900 = vmatmul.mubr.bf16.gmra.mxu0 %v818
        %v901 = vpop.f32.mrf.mxu0
        %v902 = vadd.f32 0.0, %v901
        %v903 = vpop.f32.mrf.mxu0
        %v904 = vpop.f32.mrf.mxu0
        %v905 = vadd.f32 0.0, %v904
        %v906 = vpop.f32.mrf.mxu0
        %907 = vdwg.mxu0
        %vm908 = vcmp.gt.f32.partialorder %v878, 0.0
        %vm909 = vcmp.gt.f32.partialorder %v881, 0.0
        %vm910 = vcmp.gt.f32.partialorder %v886, 0.0
        %vm911 = vcmp.gt.f32.partialorder %v889, 0.0
        %vm912 = vcmp.gt.f32.partialorder %v894, 0.0
        %vm913 = vcmp.gt.f32.partialorder %v897, 0.0
        %vm914 = vcmp.gt.f32.partialorder %v902, 0.0
        %vm915 = vcmp.gt.f32.partialorder %v905, 0.0
        %v916 = vmul.f32 %v878, 1.442695
        %v917 = vpow.pop %v916
        %v918 = vmul.f32 %v881, 1.442695
        %v919 = vpow.pop %v918
        %v920 = vmul.f32 %v886, 1.442695
        %v921 = vpow.pop %v920
        %v922 = vmul.f32 %v889, 1.442695
        %v923 = vpow.pop %v922
        %v924 = vmul.f32 %v894, 1.442695
        %v925 = vpow.pop %v924
        %v926 = vmul.f32 %v897, 1.442695
        %v927 = vpow.pop %v926
        %v928 = vmul.f32 %v902, 1.442695
        %v929 = vpow.pop %v928
        %v930 = vmul.f32 %v905, 1.442695
        %v931 = vpow.pop %v930
        %v932 = vsub.f32 %v917, 1.0
        %v933 = vsub.f32 %v919, 1.0
        %v934 = vsub.f32 %v921, 1.0
        %v935 = vsub.f32 %v923, 1.0
        %v936 = vsub.f32 %v925, 1.0
        %v937 = vsub.f32 %v927, 1.0
        %v938 = vsub.f32 %v929, 1.0
        %v939 = vsub.f32 %v931, 1.0
        %v940 = vsel %vm908, %v878, %v932
        %v941 = vsel %vm909, %v881, %v933
        %v942 = vsel %vm910, %v886, %v934
        %v943 = vsel %vm911, %v889, %v935
        %v944 = vsel %vm912, %v894, %v936
        %v945 = vsel %vm913, %v897, %v937
        %v946 = vsel %vm914, %v902, %v938
        %v947 = vsel %vm915, %v905, %v939
        %v948 = vlaneseq
        %v949 = vshrl.u32 %v948, 7
        %v950 = vsub.s32 2, %v949
        %v951 = vrot.slane %v313, %v950
        %952 = vset.pattern.permute.xlu0 2
        %953 = vperm.xlu0 %952, %v314
        %v954 = vpop.permute.xlu0 %953
        %956 = vset.pattern.permute.xlu0 2
        %957 = vperm.xlu0 %956, %v315
        %v958 = vpop.permute.xlu0 %957
        %960 = vset.pattern.permute.xlu0 2
        %961 = vperm.xlu0 %960, %v316
        %v962 = vpop.permute.xlu0 %961
        %964 = vset.pattern.permute.xlu0 2
        %965 = vperm.xlu0 %964, %v317
        %v966 = vpop.permute.xlu0 %965
        %968 = vset.pattern.permute.xlu0 2
        %969 = vperm.xlu0 %968, %v318
        %v970 = vpop.permute.xlu0 %969
        %972 = vset.pattern.permute.xlu0 2
        %973 = vperm.xlu0 %972, %v319
        %v974 = vpop.permute.xlu0 %973
        %976 = vset.pattern.permute.xlu0 2
        %977 = vperm.xlu0 %976, %v320
        %v978 = vpop.permute.xlu0 %977
        %980 = vset.pattern.permute.xlu0 2
        %981 = vperm.xlu0 %980, %v321
        %v982 = vpop.permute.xlu0 %981
        %v984 = vadd.f32 %v951, %v954
        %v985 = vadd.f32 %v951, %v958
        %v986 = vadd.f32 %v951, %v962
        %v987 = vadd.f32 %v951, %v966
        %v988 = vadd.f32 %v951, %v970
        %v989 = vadd.f32 %v951, %v974
        %v990 = vadd.f32 %v951, %v978
        %v991 = vadd.f32 %v951, %v982
        %v992 = vmul.f32 %v289, %v984
        %v993 = vmul.f32 %v290, %v985
        %v994 = vmul.f32 %v291, %v986
        %v995 = vmul.f32 %v292, %v987
        %v996 = vmul.f32 %v293, %v988
        %v997 = vmul.f32 %v294, %v989
        %v998 = vmul.f32 %v295, %v990
        %v999 = vmul.f32 %v296, %v991
        %v1000 = vmul.f32 %v992, 0.2
        %v1001 = vmul.f32 %v993, 0.2
        %v1002 = vmul.f32 %v994, 0.2
        %v1003 = vmul.f32 %v995, 0.2
        %v1004 = vmul.f32 %v996, 0.2
        %v1005 = vmul.f32 %v997, 0.2
        %v1006 = vmul.f32 %v998, 0.2
        %v1007 = vmul.f32 %v999, 0.2
        %v1008 = vmax.f32 %v992, %v1000
        %v1009 = vmax.f32 %v993, %v1001
        %v1010 = vmax.f32 %v994, %v1002
        %v1011 = vmax.f32 %v995, %v1003
        %v1012 = vmax.f32 %v996, %v1004
        %v1013 = vmax.f32 %v997, %v1005
        %v1014 = vmax.f32 %v998, %v1006
        %v1015 = vmax.f32 %v999, %v1007
        %v1016 = vsel %vm422, %v1008, -1e+30
        %v1017 = vsel %vm423, %v1009, -1e+30
        %v1018 = vsel %vm424, %v1010, -1e+30
        %v1019 = vsel %vm425, %v1011, -1e+30
        %v1020 = vsel %vm426, %v1012, -1e+30
        %v1021 = vsel %vm427, %v1013, -1e+30
        %v1022 = vsel %vm428, %v1014, -1e+30
        %v1023 = vsel %vm429, %v1015, -1e+30
        %1024 = vmax.xlane.f32.xlu0 %v1016
        %v1025 = vpop.xlane.xlu0 %1024
        %1026 = vmax.xlane.f32.xlu0 %v1017
        %v1027 = vpop.xlane.xlu0 %1026
        %1028 = vmax.xlane.f32.xlu0 %v1018
        %v1029 = vpop.xlane.xlu0 %1028
        %1030 = vmax.xlane.f32.xlu0 %v1019
        %v1031 = vpop.xlane.xlu0 %1030
        %1032 = vmax.xlane.f32.xlu0 %v1020
        %v1033 = vpop.xlane.xlu0 %1032
        %1034 = vmax.xlane.f32.xlu0 %v1021
        %v1035 = vpop.xlane.xlu0 %1034
        %1036 = vmax.xlane.f32.xlu0 %v1022
        %v1037 = vpop.xlane.xlu0 %1036
        %1038 = vmax.xlane.f32.xlu0 %v1023
        %v1039 = vpop.xlane.xlu0 %1038
        %v1040 = vsub.f32 %v1016, %v1025
        %v1041 = vsub.f32 %v1017, %v1027
        %v1042 = vsub.f32 %v1018, %v1029
        %v1043 = vsub.f32 %v1019, %v1031
        %v1044 = vsub.f32 %v1020, %v1033
        %v1045 = vsub.f32 %v1021, %v1035
        %v1046 = vsub.f32 %v1022, %v1037
        %v1047 = vsub.f32 %v1023, %v1039
        %v1048 = vmul.f32 %v1040, 1.442695
        %v1049 = vpow.pop %v1048
        %v1050 = vmul.f32 %v1041, 1.442695
        %v1051 = vpow.pop %v1050
        %v1052 = vmul.f32 %v1042, 1.442695
        %v1053 = vpow.pop %v1052
        %v1054 = vmul.f32 %v1043, 1.442695
        %v1055 = vpow.pop %v1054
        %v1056 = vmul.f32 %v1044, 1.442695
        %v1057 = vpow.pop %v1056
        %v1058 = vmul.f32 %v1045, 1.442695
        %v1059 = vpow.pop %v1058
        %v1060 = vmul.f32 %v1046, 1.442695
        %v1061 = vpow.pop %v1060
        %v1062 = vmul.f32 %v1047, 1.442695
        %v1063 = vpow.pop %v1062
        %1064 = vadd.xlane.f32.xlu0 %v1049
        %v1065 = vpop.xlane.xlu0 %1064
        %1066 = vadd.xlane.f32.xlu0 %v1051
        %v1067 = vpop.xlane.xlu0 %1066
        %1068 = vadd.xlane.f32.xlu0 %v1053
        %v1069 = vpop.xlane.xlu0 %1068
        %1070 = vadd.xlane.f32.xlu0 %v1055
        %v1071 = vpop.xlane.xlu0 %1070
        %1072 = vadd.xlane.f32.xlu0 %v1057
        %v1073 = vpop.xlane.xlu0 %1072
        %1074 = vadd.xlane.f32.xlu0 %v1059
        %v1075 = vpop.xlane.xlu0 %1074
        %1076 = vadd.xlane.f32.xlu0 %v1061
        %v1077 = vpop.xlane.xlu0 %1076
        %1078 = vadd.xlane.f32.xlu0 %v1063
        %v1079 = vpop.xlane.xlu0 %1078
        %v1080 = vrcp.pop %v1065
        %v1081 = vrcp.pop %v1067
        %v1082 = vrcp.pop %v1069
        %v1083 = vrcp.pop %v1071
        %v1084 = vrcp.pop %v1073
        %v1085 = vrcp.pop %v1075
        %v1086 = vrcp.pop %v1077
        %v1087 = vrcp.pop %v1079
        %v1088 = vmul.f32 %v1049, %v1080
        %v1089 = vmul.f32 %v1051, %v1081
        %v1090 = vmul.f32 %v1053, %v1082
        %v1091 = vmul.f32 %v1055, %v1083
        %v1092 = vmul.f32 %v1057, %v1084
        %v1093 = vmul.f32 %v1059, %v1085
        %v1094 = vmul.f32 %v1061, %v1086
        %v1095 = vmul.f32 %v1063, %v1087
        %v1096 = vpack.c.bf16 %v1089, %v1088
        %v1097 = vpack.c.bf16 %v1091, %v1090
        %v1098 = vpack.c.bf16 %v1093, %v1092
        %v1099 = vpack.c.bf16 %v1095, %v1094
        %1100 = vrot.lane.b32.xlu0 %v546, 112
        %v1101 = vpop.permute.xlu0 %1100
        %1102 = vrot.lane.b32.xlu0 %v547, 112
        %v1103 = vpop.permute.xlu0 %1102
        %1104 = vrot.lane.b32.xlu0 %v548, 112
        %v1105 = vpop.permute.xlu0 %1104
        %1106 = vrot.lane.b32.xlu0 %v549, 112
        %v1107 = vpop.permute.xlu0 %1106
        %1108 = vrot.lane.b32.xlu0 %v550, 112
        %v1109 = vpop.permute.xlu0 %1108
        %1110 = vrot.lane.b32.xlu0 %v551, 112
        %v1111 = vpop.permute.xlu0 %1110
        %1112 = vrot.lane.b32.xlu0 %v552, 112
        %v1113 = vpop.permute.xlu0 %1112
        %1114 = vrot.lane.b32.xlu0 %v553, 112
        %v1115 = vpop.permute.xlu0 %1114
        %1124 = vmatprep.subr.bf16.mxu0 0
        %1125 = vmatpush1.bf16.msra.mxu0 %v1115
        %1126 = vmatprep.subr.bf16.mxu0 0
        %1127 = vmatpush1.bf16.msra.mxu0 %v1113
        %1128 = vmatprep.subr.bf16.mxu0 0
        %1129 = vmatpush1.bf16.msra.mxu0 %v1111
        %1130 = vmatprep.subr.bf16.mxu0 0
        %1131 = vmatpush1.bf16.msra.mxu0 %v1109
        %1132 = vmatprep.subr.bf16.mxu0 0
        %1133 = vmatpush1.bf16.msra.mxu0 %v1107
        %1134 = vmatprep.subr.bf16.mxu0 0
        %1135 = vmatpush1.bf16.msra.mxu0 %v1105
        %1136 = vmatprep.subr.bf16.mxu0 0
        %1137 = vmatpush1.bf16.msra.mxu0 %v1103
        %1138 = vmatprep.subr.bf16.mxu0 0
        %1139 = vmatpush1.bf16.msra.mxu0 %v1101
        %1140 = vmatprep.subr.bf16.mxu0 0
        %1141 = vmatpush2.bf16.msra.mxu0 0
        %1142 = vmatprep.subr.bf16.mxu0 0
        %1143 = vmatpush2.bf16.msra.mxu0 0
        %1144 = vmatprep.subr.bf16.mxu0 0
        %1145 = vmatpush2.bf16.msra.mxu0 0
        %1146 = vmatprep.subr.bf16.mxu0 0
        %1147 = vmatpush2.bf16.msra.mxu0 0
        %1148 = vmatprep.subr.bf16.mxu0 0
        %1149 = vmatpush2.bf16.msra.mxu0 0
        %1150 = vmatprep.subr.bf16.mxu0 0
        %1151 = vmatpush2.bf16.msra.mxu0 0
        %1152 = vmatprep.subr.bf16.mxu0 0
        %1153 = vmatpush2.bf16.msra.mxu0 0
        %1154 = vmatprep.subr.bf16.mxu0 0
        %1155 = vmatpush2.bf16.msra.mxu0 0
        %1156 = vmatprep.mubr.bf16.mxu0 0
        %1157 = vmatmul.mubr.bf16.gmra.mxu0 %v1096
        %v1158 = vpop.f32.mrf.mxu0
        %v1159 = vadd.f32 0.0, %v1158
        %v1160 = vpop.f32.mrf.mxu0
        %v1161 = vpop.f32.mrf.mxu0
        %v1162 = vadd.f32 0.0, %v1161
        %v1163 = vpop.f32.mrf.mxu0
        %1164 = vmatprep.mubr.bf16.mxu0 0
        %1165 = vmatmul.mubr.bf16.gmra.mxu0 %v1097
        %v1166 = vpop.f32.mrf.mxu0
        %v1167 = vadd.f32 0.0, %v1166
        %v1168 = vpop.f32.mrf.mxu0
        %v1169 = vpop.f32.mrf.mxu0
        %v1170 = vadd.f32 0.0, %v1169
        %v1171 = vpop.f32.mrf.mxu0
        %1172 = vmatprep.mubr.bf16.mxu0 0
        %1173 = vmatmul.mubr.bf16.gmra.mxu0 %v1098
        %v1174 = vpop.f32.mrf.mxu0
        %v1175 = vadd.f32 0.0, %v1174
        %v1176 = vpop.f32.mrf.mxu0
        %v1177 = vpop.f32.mrf.mxu0
        %v1178 = vadd.f32 0.0, %v1177
        %v1179 = vpop.f32.mrf.mxu0
        %1180 = vmatprep.mubr.bf16.mxu0 0
        %1181 = vmatmul.mubr.bf16.gmra.mxu0 %v1099
        %v1182 = vpop.f32.mrf.mxu0
        %v1183 = vadd.f32 0.0, %v1182
        %v1184 = vpop.f32.mrf.mxu0
        %v1185 = vpop.f32.mrf.mxu0
        %v1186 = vadd.f32 0.0, %v1185
        %v1187 = vpop.f32.mrf.mxu0
        %1188 = vdwg.mxu0
        %vm1189 = vcmp.gt.f32.partialorder %v1159, 0.0
        %vm1190 = vcmp.gt.f32.partialorder %v1162, 0.0
        %vm1191 = vcmp.gt.f32.partialorder %v1167, 0.0
        %vm1192 = vcmp.gt.f32.partialorder %v1170, 0.0
        %vm1193 = vcmp.gt.f32.partialorder %v1175, 0.0
        %vm1194 = vcmp.gt.f32.partialorder %v1178, 0.0
        %vm1195 = vcmp.gt.f32.partialorder %v1183, 0.0
        %vm1196 = vcmp.gt.f32.partialorder %v1186, 0.0
        %v1197 = vmul.f32 %v1159, 1.442695
        %v1198 = vpow.pop %v1197
        %v1199 = vmul.f32 %v1162, 1.442695
        %v1200 = vpow.pop %v1199
        %v1201 = vmul.f32 %v1167, 1.442695
        %v1202 = vpow.pop %v1201
        %v1203 = vmul.f32 %v1170, 1.442695
        %v1204 = vpow.pop %v1203
        %v1205 = vmul.f32 %v1175, 1.442695
        %v1206 = vpow.pop %v1205
        %v1207 = vmul.f32 %v1178, 1.442695
        %v1208 = vpow.pop %v1207
        %v1209 = vmul.f32 %v1183, 1.442695
        %v1210 = vpow.pop %v1209
        %v1211 = vmul.f32 %v1186, 1.442695
        %v1212 = vpow.pop %v1211
        %v1213 = vsub.f32 %v1198, 1.0
        %v1214 = vsub.f32 %v1200, 1.0
        %v1215 = vsub.f32 %v1202, 1.0
        %v1216 = vsub.f32 %v1204, 1.0
        %v1217 = vsub.f32 %v1206, 1.0
        %v1218 = vsub.f32 %v1208, 1.0
        %v1219 = vsub.f32 %v1210, 1.0
        %v1220 = vsub.f32 %v1212, 1.0
        %v1221 = vsel %vm1189, %v1159, %v1213
        %v1222 = vsel %vm1190, %v1162, %v1214
        %v1223 = vsel %vm1191, %v1167, %v1215
        %v1224 = vsel %vm1192, %v1170, %v1216
        %v1225 = vsel %vm1193, %v1175, %v1217
        %v1226 = vsel %vm1194, %v1178, %v1218
        %v1227 = vsel %vm1195, %v1183, %v1219
        %v1228 = vsel %vm1196, %v1186, %v1220
        %v1229 = vlaneseq
        %v1230 = vshrl.u32 %v1229, 7
        %v1231 = vsub.s32 3, %v1230
        %v1232 = vrot.slane %v313, %v1231
        %1233 = vset.pattern.permute.xlu0 3
        %1234 = vperm.xlu0 %1233, %v314
        %v1235 = vpop.permute.xlu0 %1234
        %1237 = vset.pattern.permute.xlu0 3
        %1238 = vperm.xlu0 %1237, %v315
        %v1239 = vpop.permute.xlu0 %1238
        %1241 = vset.pattern.permute.xlu0 3
        %1242 = vperm.xlu0 %1241, %v316
        %v1243 = vpop.permute.xlu0 %1242
        %1245 = vset.pattern.permute.xlu0 3
        %1246 = vperm.xlu0 %1245, %v317
        %v1247 = vpop.permute.xlu0 %1246
        %1249 = vset.pattern.permute.xlu0 3
        %1250 = vperm.xlu0 %1249, %v318
        %v1251 = vpop.permute.xlu0 %1250
        %1253 = vset.pattern.permute.xlu0 3
        %1254 = vperm.xlu0 %1253, %v319
        %v1255 = vpop.permute.xlu0 %1254
        %1257 = vset.pattern.permute.xlu0 3
        %1258 = vperm.xlu0 %1257, %v320
        %v1259 = vpop.permute.xlu0 %1258
        %1261 = vset.pattern.permute.xlu0 3
        %1262 = vperm.xlu0 %1261, %v321
        %v1263 = vpop.permute.xlu0 %1262
        %v1265 = vadd.f32 %v1232, %v1235
        %v1266 = vadd.f32 %v1232, %v1239
        %v1267 = vadd.f32 %v1232, %v1243
        %v1268 = vadd.f32 %v1232, %v1247
        %v1269 = vadd.f32 %v1232, %v1251
        %v1270 = vadd.f32 %v1232, %v1255
        %v1271 = vadd.f32 %v1232, %v1259
        %v1272 = vadd.f32 %v1232, %v1263
        %v1273 = vmul.f32 %v289, %v1265
        %v1274 = vmul.f32 %v290, %v1266
        %v1275 = vmul.f32 %v291, %v1267
        %v1276 = vmul.f32 %v292, %v1268
        %v1277 = vmul.f32 %v293, %v1269
        %v1278 = vmul.f32 %v294, %v1270
        %v1279 = vmul.f32 %v295, %v1271
        %v1280 = vmul.f32 %v296, %v1272
        %v1281 = vmul.f32 %v1273, 0.2
        %v1282 = vmul.f32 %v1274, 0.2
        %v1283 = vmul.f32 %v1275, 0.2
        %v1284 = vmul.f32 %v1276, 0.2
        %v1285 = vmul.f32 %v1277, 0.2
        %v1286 = vmul.f32 %v1278, 0.2
        %v1287 = vmul.f32 %v1279, 0.2
        %v1288 = vmul.f32 %v1280, 0.2
        %v1289 = vmax.f32 %v1273, %v1281
        %v1290 = vmax.f32 %v1274, %v1282
        %v1291 = vmax.f32 %v1275, %v1283
        %v1292 = vmax.f32 %v1276, %v1284
        %v1293 = vmax.f32 %v1277, %v1285
        %v1294 = vmax.f32 %v1278, %v1286
        %v1295 = vmax.f32 %v1279, %v1287
        %v1296 = vmax.f32 %v1280, %v1288
        %v1297 = vsel %vm422, %v1289, -1e+30
        %v1298 = vsel %vm423, %v1290, -1e+30
        %v1299 = vsel %vm424, %v1291, -1e+30
        %v1300 = vsel %vm425, %v1292, -1e+30
        %v1301 = vsel %vm426, %v1293, -1e+30
        %v1302 = vsel %vm427, %v1294, -1e+30
        %v1303 = vsel %vm428, %v1295, -1e+30
        %v1304 = vsel %vm429, %v1296, -1e+30
        %1305 = vmax.xlane.f32.xlu0 %v1297
        %v1306 = vpop.xlane.xlu0 %1305
        %1307 = vmax.xlane.f32.xlu0 %v1298
        %v1308 = vpop.xlane.xlu0 %1307
        %1309 = vmax.xlane.f32.xlu0 %v1299
        %v1310 = vpop.xlane.xlu0 %1309
        %1311 = vmax.xlane.f32.xlu0 %v1300
        %v1312 = vpop.xlane.xlu0 %1311
        %1313 = vmax.xlane.f32.xlu0 %v1301
        %v1314 = vpop.xlane.xlu0 %1313
        %1315 = vmax.xlane.f32.xlu0 %v1302
        %v1316 = vpop.xlane.xlu0 %1315
        %1317 = vmax.xlane.f32.xlu0 %v1303
        %v1318 = vpop.xlane.xlu0 %1317
        %1319 = vmax.xlane.f32.xlu0 %v1304
        %v1320 = vpop.xlane.xlu0 %1319
        %v1321 = vsub.f32 %v1297, %v1306
        %v1322 = vsub.f32 %v1298, %v1308
        %v1323 = vsub.f32 %v1299, %v1310
        %v1324 = vsub.f32 %v1300, %v1312
        %v1325 = vsub.f32 %v1301, %v1314
        %v1326 = vsub.f32 %v1302, %v1316
        %v1327 = vsub.f32 %v1303, %v1318
        %v1328 = vsub.f32 %v1304, %v1320
        %v1329 = vmul.f32 %v1321, 1.442695
        %v1330 = vpow.pop %v1329
        %v1331 = vmul.f32 %v1322, 1.442695
        %v1332 = vpow.pop %v1331
        %v1333 = vmul.f32 %v1323, 1.442695
        %v1334 = vpow.pop %v1333
        %v1335 = vmul.f32 %v1324, 1.442695
        %v1336 = vpow.pop %v1335
        %v1337 = vmul.f32 %v1325, 1.442695
        %v1338 = vpow.pop %v1337
        %v1339 = vmul.f32 %v1326, 1.442695
        %v1340 = vpow.pop %v1339
        %v1341 = vmul.f32 %v1327, 1.442695
        %v1342 = vpow.pop %v1341
        %v1343 = vmul.f32 %v1328, 1.442695
        %v1344 = vpow.pop %v1343
        %1345 = vadd.xlane.f32.xlu0 %v1330
        %v1346 = vpop.xlane.xlu0 %1345
        %1347 = vadd.xlane.f32.xlu0 %v1332
        %v1348 = vpop.xlane.xlu0 %1347
        %1349 = vadd.xlane.f32.xlu0 %v1334
        %v1350 = vpop.xlane.xlu0 %1349
        %1351 = vadd.xlane.f32.xlu0 %v1336
        %v1352 = vpop.xlane.xlu0 %1351
        %1353 = vadd.xlane.f32.xlu0 %v1338
        %v1354 = vpop.xlane.xlu0 %1353
        %1355 = vadd.xlane.f32.xlu0 %v1340
        %v1356 = vpop.xlane.xlu0 %1355
        %1357 = vadd.xlane.f32.xlu0 %v1342
        %v1358 = vpop.xlane.xlu0 %1357
        %1359 = vadd.xlane.f32.xlu0 %v1344
        %v1360 = vpop.xlane.xlu0 %1359
        %v1361 = vrcp.pop %v1346
        %v1362 = vrcp.pop %v1348
        %v1363 = vrcp.pop %v1350
        %v1364 = vrcp.pop %v1352
        %v1365 = vrcp.pop %v1354
        %v1366 = vrcp.pop %v1356
        %v1367 = vrcp.pop %v1358
        %v1368 = vrcp.pop %v1360
        %v1369 = vmul.f32 %v1330, %v1361
        %v1370 = vmul.f32 %v1332, %v1362
        %v1371 = vmul.f32 %v1334, %v1363
        %v1372 = vmul.f32 %v1336, %v1364
        %v1373 = vmul.f32 %v1338, %v1365
        %v1374 = vmul.f32 %v1340, %v1366
        %v1375 = vmul.f32 %v1342, %v1367
        %v1376 = vmul.f32 %v1344, %v1368
        %v1377 = vpack.c.bf16 %v1370, %v1369
        %v1378 = vpack.c.bf16 %v1372, %v1371
        %v1379 = vpack.c.bf16 %v1374, %v1373
        %v1380 = vpack.c.bf16 %v1376, %v1375
        %1381 = vrot.lane.b32.xlu0 %v546, 104
        %v1382 = vpop.permute.xlu0 %1381
        %1383 = vrot.lane.b32.xlu0 %v547, 104
        %v1384 = vpop.permute.xlu0 %1383
        %1385 = vrot.lane.b32.xlu0 %v548, 104
        %v1386 = vpop.permute.xlu0 %1385
        %1387 = vrot.lane.b32.xlu0 %v549, 104
        %v1388 = vpop.permute.xlu0 %1387
        %1389 = vrot.lane.b32.xlu0 %v550, 104
        %v1390 = vpop.permute.xlu0 %1389
        %1391 = vrot.lane.b32.xlu0 %v551, 104
        %v1392 = vpop.permute.xlu0 %1391
        %1393 = vrot.lane.b32.xlu0 %v552, 104
        %v1394 = vpop.permute.xlu0 %1393
        %1395 = vrot.lane.b32.xlu0 %v553, 104
        %v1396 = vpop.permute.xlu0 %1395
        %1405 = vmatprep.subr.bf16.mxu0 0
        %1406 = vmatpush1.bf16.msra.mxu0 %v1396
        %1407 = vmatprep.subr.bf16.mxu0 0
        %1408 = vmatpush1.bf16.msra.mxu0 %v1394
        %1409 = vmatprep.subr.bf16.mxu0 0
        %1410 = vmatpush1.bf16.msra.mxu0 %v1392
        %1411 = vmatprep.subr.bf16.mxu0 0
        %1412 = vmatpush1.bf16.msra.mxu0 %v1390
        %1413 = vmatprep.subr.bf16.mxu0 0
        %1414 = vmatpush1.bf16.msra.mxu0 %v1388
        %1415 = vmatprep.subr.bf16.mxu0 0
        %1416 = vmatpush1.bf16.msra.mxu0 %v1386
        %1417 = vmatprep.subr.bf16.mxu0 0
        %1418 = vmatpush1.bf16.msra.mxu0 %v1384
        %1419 = vmatprep.subr.bf16.mxu0 0
        %1420 = vmatpush1.bf16.msra.mxu0 %v1382
        %1421 = vmatprep.subr.bf16.mxu0 0
        %1422 = vmatpush2.bf16.msra.mxu0 0
        %1423 = vmatprep.subr.bf16.mxu0 0
        %1424 = vmatpush2.bf16.msra.mxu0 0
        %1425 = vmatprep.subr.bf16.mxu0 0
        %1426 = vmatpush2.bf16.msra.mxu0 0
        %1427 = vmatprep.subr.bf16.mxu0 0
        %1428 = vmatpush2.bf16.msra.mxu0 0
        %1429 = vmatprep.subr.bf16.mxu0 0
        %1430 = vmatpush2.bf16.msra.mxu0 0
        %1431 = vmatprep.subr.bf16.mxu0 0
        %1432 = vmatpush2.bf16.msra.mxu0 0
        %1433 = vmatprep.subr.bf16.mxu0 0
        %1434 = vmatpush2.bf16.msra.mxu0 0
        %1435 = vmatprep.subr.bf16.mxu0 0
        %1436 = vmatpush2.bf16.msra.mxu0 0
        %1437 = vmatprep.mubr.bf16.mxu0 0
        %1438 = vmatmul.mubr.bf16.gmra.mxu0 %v1377
        %v1439 = vpop.f32.mrf.mxu0
        %v1440 = vadd.f32 0.0, %v1439
        %v1441 = vpop.f32.mrf.mxu0
        %v1442 = vpop.f32.mrf.mxu0
        %v1443 = vadd.f32 0.0, %v1442
        %v1444 = vpop.f32.mrf.mxu0
        %1445 = vmatprep.mubr.bf16.mxu0 0
        %1446 = vmatmul.mubr.bf16.gmra.mxu0 %v1378
        %v1447 = vpop.f32.mrf.mxu0
        %v1448 = vadd.f32 0.0, %v1447
        %v1449 = vpop.f32.mrf.mxu0
        %v1450 = vpop.f32.mrf.mxu0
        %v1451 = vadd.f32 0.0, %v1450
        %v1452 = vpop.f32.mrf.mxu0
        %1453 = vmatprep.mubr.bf16.mxu0 0
        %1454 = vmatmul.mubr.bf16.gmra.mxu0 %v1379
        %v1455 = vpop.f32.mrf.mxu0
        %v1456 = vadd.f32 0.0, %v1455
        %v1457 = vpop.f32.mrf.mxu0
        %v1458 = vpop.f32.mrf.mxu0
        %v1459 = vadd.f32 0.0, %v1458
        %v1460 = vpop.f32.mrf.mxu0
        %1461 = vmatprep.mubr.bf16.mxu0 0
        %1462 = vmatmul.mubr.bf16.gmra.mxu0 %v1380
        %v1463 = vpop.f32.mrf.mxu0
        %v1464 = vadd.f32 0.0, %v1463
        %v1465 = vpop.f32.mrf.mxu0
        %v1466 = vpop.f32.mrf.mxu0
        %v1467 = vadd.f32 0.0, %v1466
        %v1468 = vpop.f32.mrf.mxu0
        %1469 = vdwg.mxu0
        %vm1470 = vcmp.gt.f32.partialorder %v1440, 0.0
        %vm1471 = vcmp.gt.f32.partialorder %v1443, 0.0
        %vm1472 = vcmp.gt.f32.partialorder %v1448, 0.0
        %vm1473 = vcmp.gt.f32.partialorder %v1451, 0.0
        %vm1474 = vcmp.gt.f32.partialorder %v1456, 0.0
        %vm1475 = vcmp.gt.f32.partialorder %v1459, 0.0
        %vm1476 = vcmp.gt.f32.partialorder %v1464, 0.0
        %vm1477 = vcmp.gt.f32.partialorder %v1467, 0.0
        %v1478 = vmul.f32 %v1440, 1.442695
        %v1479 = vpow.pop %v1478
        %v1480 = vmul.f32 %v1443, 1.442695
        %v1481 = vpow.pop %v1480
        %v1482 = vmul.f32 %v1448, 1.442695
        %v1483 = vpow.pop %v1482
        %v1484 = vmul.f32 %v1451, 1.442695
        %v1485 = vpow.pop %v1484
        %v1486 = vmul.f32 %v1456, 1.442695
        %v1487 = vpow.pop %v1486
        %v1488 = vmul.f32 %v1459, 1.442695
        %v1489 = vpow.pop %v1488
        %v1490 = vmul.f32 %v1464, 1.442695
        %v1491 = vpow.pop %v1490
        %v1492 = vmul.f32 %v1467, 1.442695
        %v1493 = vpow.pop %v1492
        %v1494 = vsub.f32 %v1479, 1.0
        %v1495 = vsub.f32 %v1481, 1.0
        %v1496 = vsub.f32 %v1483, 1.0
        %v1497 = vsub.f32 %v1485, 1.0
        %v1498 = vsub.f32 %v1487, 1.0
        %v1499 = vsub.f32 %v1489, 1.0
        %v1500 = vsub.f32 %v1491, 1.0
        %v1501 = vsub.f32 %v1493, 1.0
        %v1502 = vsel %vm1470, %v1440, %v1494
        %v1503 = vsel %vm1471, %v1443, %v1495
        %v1504 = vsel %vm1472, %v1448, %v1496
        %v1505 = vsel %vm1473, %v1451, %v1497
        %v1506 = vsel %vm1474, %v1456, %v1498
        %v1507 = vsel %vm1475, %v1459, %v1499
        %v1508 = vsel %vm1476, %v1464, %v1500
        %v1509 = vsel %vm1477, %v1467, %v1501
        %1518 = vrot.lane.b32.xlu0 %v940, 8
        %v1519 = vpop.permute.xlu0 %1518
        %1520 = vrot.lane.b32.xlu0 %v941, 8
        %v1521 = vpop.permute.xlu0 %1520
        %1522 = vrot.lane.b32.xlu0 %v942, 8
        %v1523 = vpop.permute.xlu0 %1522
        %1524 = vrot.lane.b32.xlu0 %v943, 8
        %v1525 = vpop.permute.xlu0 %1524
        %1526 = vrot.lane.b32.xlu0 %v944, 8
        %v1527 = vpop.permute.xlu0 %1526
        %1528 = vrot.lane.b32.xlu0 %v945, 8
        %v1529 = vpop.permute.xlu0 %1528
        %1530 = vrot.lane.b32.xlu0 %v946, 8
        %v1531 = vpop.permute.xlu0 %1530
        %1532 = vrot.lane.b32.xlu0 %v947, 8
        %v1533 = vpop.permute.xlu0 %1532
        %1550 = vrot.lane.b32.xlu0 %v1221, 16
        %v1551 = vpop.permute.xlu0 %1550
        %1552 = vrot.lane.b32.xlu0 %v1222, 16
        %v1553 = vpop.permute.xlu0 %1552
        %1554 = vrot.lane.b32.xlu0 %v1223, 16
        %v1555 = vpop.permute.xlu0 %1554
        %1556 = vrot.lane.b32.xlu0 %v1224, 16
        %v1557 = vpop.permute.xlu0 %1556
        %1558 = vrot.lane.b32.xlu0 %v1225, 16
        %v1559 = vpop.permute.xlu0 %1558
        %1560 = vrot.lane.b32.xlu0 %v1226, 16
        %v1561 = vpop.permute.xlu0 %1560
        %1562 = vrot.lane.b32.xlu0 %v1227, 16
        %v1563 = vpop.permute.xlu0 %1562
        %1564 = vrot.lane.b32.xlu0 %v1228, 16
        %v1565 = vpop.permute.xlu0 %1564
        %1582 = vrot.lane.b32.xlu0 %v1502, 24
        %v1583 = vpop.permute.xlu0 %1582
        %1584 = vrot.lane.b32.xlu0 %v1503, 24
        %v1585 = vpop.permute.xlu0 %1584
        %1586 = vrot.lane.b32.xlu0 %v1504, 24
        %v1587 = vpop.permute.xlu0 %1586
        %1588 = vrot.lane.b32.xlu0 %v1505, 24
        %v1589 = vpop.permute.xlu0 %1588
        %1590 = vrot.lane.b32.xlu0 %v1506, 24
        %v1591 = vpop.permute.xlu0 %1590
        %1592 = vrot.lane.b32.xlu0 %v1507, 24
        %v1593 = vpop.permute.xlu0 %1592
        %1594 = vrot.lane.b32.xlu0 %v1508, 24
        %v1595 = vpop.permute.xlu0 %1594
        %1596 = vrot.lane.b32.xlu0 %v1509, 24
        %v1597 = vpop.permute.xlu0 %1596
        %vm1606 = vcmask 64512
        %v1607 = vsel %vm1606, %v659, %v1519
        %v1608 = vsel %vm1606, %v660, %v1521
        %v1609 = vsel %vm1606, %v661, %v1523
        %v1610 = vsel %vm1606, %v662, %v1525
        %v1611 = vsel %vm1606, %v663, %v1527
        %v1612 = vsel %vm1606, %v664, %v1529
        %v1613 = vsel %vm1606, %v665, %v1531
        %v1614 = vsel %vm1606, %v666, %v1533
        %vm1615 = vcmask 130048
        %v1616 = vsel %vm1615, %v1607, %v1551
        %v1617 = vsel %vm1615, %v1608, %v1553
        %v1618 = vsel %vm1615, %v1609, %v1555
        %v1619 = vsel %vm1615, %v1610, %v1557
        %v1620 = vsel %vm1615, %v1611, %v1559
        %v1621 = vsel %vm1615, %v1612, %v1561
        %v1622 = vsel %vm1615, %v1613, %v1563
        %v1623 = vsel %vm1615, %v1614, %v1565
        %vm1624 = vcmask 195584
        %v1625 = vsel %vm1624, %v1616, %v1583
        %v1626 = vsel %vm1624, %v1617, %v1585
        %v1627 = vsel %vm1624, %v1618, %v1587
        %v1628 = vsel %vm1624, %v1619, %v1589
        %v1629 = vsel %vm1624, %v1620, %v1591
        %v1630 = vsel %vm1624, %v1621, %v1593
        %v1631 = vsel %vm1624, %v1622, %v1595
        %v1632 = vsel %vm1624, %v1623, %v1597
        %vm1633 = vcmask 261120
        %v1634 = vsel %vm1633, %v1625, 0.0
        %v1635 = vsel %vm1633, %v1626, 0.0
        %v1636 = vsel %vm1633, %v1627, 0.0
        %v1637 = vsel %vm1633, %v1628, 0.0
        %v1638 = vsel %vm1633, %v1629, 0.0
        %v1639 = vsel %vm1633, %v1630, 0.0
        %v1640 = vsel %vm1633, %v1631, 0.0
        %v1641 = vsel %vm1633, %v1632, 0.0
        %v1642 = vadd.f32 %v1634, %v322
        %v1643 = vadd.f32 %v1635, %v323
        %v1644 = vadd.f32 %v1636, %v324
        %v1645 = vadd.f32 %v1637, %v325
        %v1646 = vadd.f32 %v1638, %v326
        %v1647 = vadd.f32 %v1639, %v327
        %v1648 = vadd.f32 %v1640, %v328
        %v1649 = vadd.f32 %v1641, %v329
        %1650 = vst [vmem:[%s250] sm:$0xff] %v1642
        %1651 = vst [vmem:[%s250 + $0x8] sm:$0xff] %v1643
        %1652 = vst [vmem:[%s250 + $0x10] sm:$0xff] %v1644
        %1653 = vst [vmem:[%s250 + $0x18] sm:$0xff] %v1645
        %1654 = vst [vmem:[%s250 + $0x20] sm:$0xff] %v1646
        %1655 = vst [vmem:[%s250 + $0x28] sm:$0xff] %v1647
        %1656 = vst [vmem:[%s250 + $0x30] sm:$0xff] %v1648
        %1657 = vst [vmem:[%s250 + $0x38] sm:$0xff] %v1649
        %s1658 = sand.u32 %s147, 1
        %s1659 = scalar_lea.sflag [#allocation3], %s1658
        %s1660 = sand.u32 %s147, 1
        %s1661 = smul.addr %s1660, 64
        %s1662 = scalar_lea.vmem [#allocation2], %s1661
        // Predicated region
        $region41: #{tpu_custom_call.1} parent=39 // pred_check
          %p1663 = pneg %p157
        $region42: #{tpu_custom_call.1} parent=39 // pred_check_branch
          %1665 = sbr.rel (%p1663) target = $region44
        $region43: #{tpu_custom_call.1} parent=39 // pred_region
          %s1666 = smul.u32 8, %s19
          %s1668 = ssub.s32 1024, 1024
          %1669 = vsyncadd %s1659, %s1668
          %s1670 = smul.addr %s1666, 128
          %s1671 = scalar_lea.hbm %s5, %s1670
          %s1672 = sshll.u32 %s1662, 4
          %s1673 = int_to_ptr.vmem [resolvable:$true] %s1672
          %1678 = dma.vmem_to_hbm [thread:$0]  %s1673, 1024, %s1671, %s1659, 128, 128, 8
        $region44: #{tpu_custom_call.1} parent=39 // pred_fallthru
          _
      $region40: #{tpu_custom_call.1} parent=5 // pred_fallthru
        _
      %p1679 = scmp.le.s32.totalorder 2, %s14
      // Predicated region
      $region45: #{tpu_custom_call.1} parent=5 // pred_check
        %p1680 = pneg %p1679
      $region46: #{tpu_custom_call.1} parent=5 // pred_check_branch
        %1682 = sbr.rel (%p1680) target = $region48
      $region47: #{tpu_custom_call.1} parent=5 // pred_region
        %s1683 = ssub.s32 %s14, 2
        // Predicated region
        $region49: #{tpu_custom_call.1} parent=47 // pred_check
          %p1684 = pneg %p163
        $region50: #{tpu_custom_call.1} parent=47 // pred_check_branch
          %1686 = sbr.rel (%p1684) target = $region52
        $region51: #{tpu_custom_call.1} parent=47 // pred_region
          %s1687 = sand.u32 %s148, 1
          %s1688 = scalar_lea.sflag [#allocation3], %s1687
          %s1689 = sand.u32 %s148, 1
          %s1690 = smul.addr %s1689, 64
          %s1691 = scalar_lea.vmem [#allocation2], %s1690
          %1692 = dma.done %s1688, 1024
        $region52: #{tpu_custom_call.1} parent=47 // pred_fallthru
          _
      $region48: #{tpu_custom_call.1} parent=5 // pred_fallthru
        _
    $region6: #{tpu_custom_call.1} parent=1 // loop_footer
      %s18 = sadd.s32 1, %s14
    $region7: #{tpu_custom_call.1} parent=1 // loop_footer_branch
      %13 = sbr.rel target = $region3
    $region8: #{tpu_custom_call.1} parent=1 // loop_exit
      _
    %1693 = vsyncpa [#allocation3], 1
    %s1694 = scalar_lea.sflag [#allocation3], 1
    %1695 = vsyncpa %s1694, 1

</llo_original>
